<compile_context>
chip_gen: v7x
topology: tpu7x:2x2x1
jax: 0.10.0
libtpu: 0.0.40
codegen_flags: <defaults>
</compile_context>

<pallas_src>
import jax
import jax.numpy as jnp
from jax import lax
from jax.experimental import pallas as pl
from jax.experimental.pallas import tpu as pltpu

_LANE = 128
_MIB = 1024 * 1024


def _round_up(x, m):
    return (x + m - 1) // m * m


def _work_bytes(tile_h, W, Cp, in_isz, out_isz):
    """Rough per-grid-step VMEM working set (bytes)."""
    weights = 2 * 9 * Cp * Cp * in_isz                 # resident fused taps, x2 buffers
    halo = 2 * W * Cp * in_isz                         # halo row block, x2 buffers
    inp = 2 * tile_h * W * Cp * in_isz                 # input block, double buffered
    outp = 2 * 4 * tile_h * W * Cp * out_isz           # (TH, 2, W, 2*Cp) block, x2 buffers
    tmp = ((tile_h + 1) * W * Cp * (in_isz + 9 * 4)    # extended input + fused f32 result
           + 6 * tile_h * W * Cp * 4)                  # shifted taps / slab accumulators
    return weights + halo + inp + outp + tmp


def _pick_tile_h(N, H, W, Cp, in_isz, out_isz, budget_bytes, min_grid_steps=4):
    """Largest tile height that fits the VMEM budget while keeping enough grid steps."""
    budget = int(budget_bytes * 0.8)                   # ~20% headroom for Mosaic scratch
    th = 1
    for cand in range(1, H + 1):
        if _work_bytes(cand, W, Cp, in_isz, out_isz) <= budget:
            th = cand
        else:
            break
    # keep >= min_grid_steps total grid steps (megacore on v7x / pipeline depth)
    steps_per_image = max(1, -(-min_grid_steps // max(N, 1)))
    th = min(th, max(1, -(-H // steps_per_image)))
    if th >= 8:
        th -= th % 8                                   # sublane-friendly
    return max(1, min(th, H))


def _transition_up_kernel(x_ref, xh_ref, w_ref, y_ref):
    # x_ref : (1, TH, W, Cp)      input tile (compute dtype)
    # xh_ref: (1, 1,  W, Cp)      halo row = first row of the tile below
    # w_ref : (Cp, 9*Cp)          fused taps: cols [t*Cp:(t+1)*Cp] = W[kh, kw], t = 3*kh+kw
    # y_ref : (1, TH, 2, W, 2*Cp) out[2m+ph, 2n+pw, c] = y[m, ph, n, pw*Cp + c]
    _, TH, W, Cp = x_ref.shape
    out_dt = y_ref.dtype

    # Halo row lies outside the image on the last H-tile -> zero its contribution.
    i = pl.program_id(1)
    scale = (i + 1 < pl.num_programs(1)).astype(x_ref.dtype)
    halo = xh_ref[0, 0] * scale                                    # (W, Cp)

    # One fused MXU matmul: all 9 taps for the tile rows AND the halo row, f32 accum.
    xe = jnp.concatenate([x_ref[0], halo[None]], axis=0)           # (TH+1, W, Cp)
    r = lax.dot_general(
        xe.reshape((TH + 1) * W, Cp), w_ref[...],
        dimension_numbers=(((1,), (0,)), ((), ())),
        preferred_element_type=jnp.float32)                        # ((TH+1)*W, 9*Cp) f32

    def tap(kh, kw, shift_row):
        t = 3 * kh + kw
        v = r[:, t * Cp:(t + 1) * Cp].reshape(TH + 1, W, Cp)       # lane-aligned slice
        return v[1:TH + 1] if shift_row else v[0:TH]               # whole-slab row select

    if W > 1:
        zcol = jnp.zeros((TH, 1, Cp), jnp.float32)

        def colshift(v):
            # v[:, n, :] -> v[:, n+1, :]; zero at the image's last column.
            return jnp.concatenate([v[:, 1:, :], zcol], axis=1)
    else:
        def colshift(v):
            return jnp.zeros_like(v)

    # Parity slabs, accumulated in f32, stored densely exactly once each.
    s00 = tap(1, 1, False)
    s01 = tap(1, 2, False) + colshift(tap(1, 0, False))
    s10 = tap(2, 1, False) + tap(0, 1, True)
    s11 = (tap(2, 2, False) + colshift(tap(2, 0, False))
           + tap(0, 2, True) + colshift(tap(0, 0, True)))

    y_ref[0, :, 0, :, pl.ds(0, Cp)] = s00.astype(out_dt)
    y_ref[0, :, 0, :, pl.ds(Cp, Cp)] = s01.astype(out_dt)
    y_ref[0, :, 1, :, pl.ds(0, Cp)] = s10.astype(out_dt)
    y_ref[0, :, 1, :, pl.ds(Cp, Cp)] = s11.astype(out_dt)


def transition_up_nhwc(x_nhwc, w_hwio, *, out_dtype=None, compute_dtype=None,
                       tile_h=None, vmem_limit_bytes=None,
                       vmem_budget_bytes=24 * _MIB):
    """NHWC-in / NHWC-out TransitionUp.  w_hwio: (3, 3, Cin, Cout) with Cin == Cout.

    vmem_budget_bytes: ~24 MiB is safe for v7x (64 MiB VMEM); raise to 48-64 MiB on
    v5e / v6e (128 MiB VMEM) for larger tiles.  compute_dtype=jnp.bfloat16 is the
    recommended fast path for this memory-bound op (accumulation stays f32).
    """
    N, H, W, C = x_nhwc.shape
    assert w_hwio.shape == (3, 3, C, C), (w_hwio.shape, x_nhwc.shape)
    if out_dtype is None:
        out_dtype = x_nhwc.dtype
    if compute_dtype is None:
        compute_dtype = x_nhwc.dtype

    x = x_nhwc.astype(compute_dtype)
    w = w_hwio.astype(compute_dtype)

    # Pad channels to a lane multiple: zero channels contribute nothing, sliced off below.
    Cp = _round_up(C, _LANE)
    if Cp != C:
        x = jnp.pad(x, ((0, 0), (0, 0), (0, 0), (0, Cp - C)))
        w = jnp.pad(w, ((0, 0), (0, 0), (0, Cp - C), (0, Cp - C)))
    # Fused tap weights: columns [t*Cp:(t+1)*Cp] hold W[kh, kw] with t = 3*kh + kw.
    w2 = jnp.transpose(w, (2, 0, 1, 3)).reshape(Cp, 9 * Cp)

    in_isz = jnp.dtype(compute_dtype).itemsize
    out_isz = jnp.dtype(out_dtype).itemsize
    if tile_h is None:
        tile_h = _pick_tile_h(N, H, W, Cp, in_isz, out_isz, vmem_budget_bytes)
    tile_h = int(max(1, min(tile_h, H)))
    n_th = -(-H // tile_h)
    Hp = n_th * tile_h
    if Hp != H:
        # Zero rows contribute nothing; the extra output rows are sliced off below.
        x = jnp.pad(x, ((0, 0), (0, Hp - H), (0, 0), (0, 0)))

    if vmem_limit_bytes is None:
        ws = _work_bytes(tile_h, W, Cp, in_isz, out_isz)
        vmem_limit_bytes = int(min(max(int(ws * 1.3), 32 * _MIB), 100 * _MIB))

    y = pl.pallas_call(
        _transition_up_kernel,
        out_shape=jax.ShapeDtypeStruct((N, Hp, 2, W, 2 * Cp), out_dtype),
        grid=(N, n_th),
        in_specs=[
            # main input tile
            pl.BlockSpec((1, tile_h, W, Cp), lambda n, i: (n, i, 0, 0)),
            # 1-row halo: first row of the tile below (clamped; zeroed on the last tile)
            pl.BlockSpec((1, 1, W, Cp),
                         lambda n, i: (n, jnp.minimum((i + 1) * tile_h, Hp - 1), 0, 0)),
            # fused tap weights: constant block index -> DMA'd once, stays resident
            pl.BlockSpec((Cp, 9 * Cp), lambda n, i: (0, 0)),
        ],
        out_specs=pl.BlockSpec((1, tile_h, 2, W, 2 * Cp),
                               lambda n, i: (n, i, 0, 0, 0)),
        compiler_params=pltpu.CompilerParams(
            dimension_semantics=("parallel", "parallel"),
            vmem_limit_bytes=vmem_limit_bytes),
    )(x, x, w2)

    # Free de-interleave: (N, Hp, 2, W, 2*Cp) -> (N, 2*Hp, 2*W, Cp) is a contiguous reshape.
    y = y.reshape(N, 2 * Hp, 2 * W, Cp)
    return y[:, :2 * H, :, :C]


def transition_up(x_nchw, w_torch, **kwargs):
    """PyTorch-layout TransitionUp.

    x_nchw : (N, C, H, W);  w_torch : (Cin, Cout, 3, 3) (ConvTranspose2d weight layout).
    Returns (N, C, 2H, 2W).
    """
    x = jnp.transpose(x_nchw, (0, 2, 3, 1))                    # NCHW -> NHWC
    w = jnp.transpose(w_torch, (2, 3, 0, 1))                   # -> (3, 3, Cin, Cout)
    y = transition_up_nhwc(x, w, **kwargs)                     # (N, 2H, 2W, C)
    return jnp.transpose(y, (0, 3, 1, 2))                      # -> NCHW


def _reference(x_nchw, w_torch):
    """Reference transposed conv via lhs-dilated forward conv (pure XLA)."""
    x = jnp.transpose(x_nchw, (0, 2, 3, 1))                    # NHWC
    w = jnp.transpose(w_torch, (2, 3, 0, 1))                   # (kh, kw, Cin, Cout)
    w_flip = w[::-1, ::-1]                                     # spatial flip, HWIO
    y = lax.conv_general_dilated(
        x, w_flip,
        window_strides=(1, 1),
        padding=[(1, 2), (1, 2)],                              # (k-1-p, k-1-p+output_padding)
        lhs_dilation=(2, 2),
        rhs_dilation=(1, 1),
        dimension_numbers=("NHWC", "HWIO", "NHWC"))
    return jnp.transpose(y, (0, 3, 1, 2))


if __name__ == "__main__":
    key = jax.random.PRNGKey(0)
    kx, kw_ = jax.random.split(key)

    N, C, H, W = 2, 4, 16, 16
    x = jax.random.normal(kx, (N, C, H, W), dtype=jnp.float32)
    # PyTorch ConvTranspose2d weight layout: (Cin, Cout, kh, kw)
    w = 0.1 * jax.random.normal(kw_, (C, C, 3, 3), dtype=jnp.float32)

    ref = jax.block_until_ready(_reference(x, w))

    # f32, explicit tile_h=8 -> two H-tiles per image (exercises the halo path).
    out = jax.block_until_ready(transition_up(x, w, tile_h=8))
    assert out.shape == (N, C, 2 * H, 2 * W), out.shape
    assert jnp.allclose(out, ref, atol=1e-5, rtol=1e-5), \
        f"f32 tiled max err {jnp.max(jnp.abs(out - ref))}"

    # f32, auto tile size (VMEM-budget + min-grid-steps picker).
    out_auto = jax.block_until_ready(transition_up(x, w))
    assert jnp.allclose(out_auto, ref, atol=1e-5, rtol=1e-5), \
        f"f32 auto max err {jnp.max(jnp.abs(out_auto - ref))}"

    # f32, tile_h that does NOT divide H (exercises the H-padding path).
    out_pad = jax.block_until_ready(transition_up(x, w, tile_h=5))
    assert jnp.allclose(out_pad, ref, atol=1e-5, rtol=1e-5), \
        f"f32 padded-H max err {jnp.max(jnp.abs(out_pad - ref))}"

    # bf16 storage/compute with f32 accumulation (memory-bound fast path).
    out_bf16 = jax.block_until_ready(
        transition_up(x, w, tile_h=8, compute_dtype=jnp.bfloat16))
    assert jnp.allclose(out_bf16, ref, atol=5e-2, rtol=5e-2), \
        f"bf16 max err {jnp.max(jnp.abs(out_bf16 - ref))}"

    # NHWC end-to-end entry point (no NCHW<->NHWC transposes, reshape-only de-interleave).
    x_nhwc = jnp.transpose(x, (0, 2, 3, 1))
    w_hwio = jnp.transpose(w, (2, 3, 0, 1))
    out_nhwc = jax.block_until_ready(transition_up_nhwc(x_nhwc, w_hwio, tile_h=8))
    assert jnp.allclose(out_nhwc, jnp.transpose(ref, (0, 2, 3, 1)),
                        atol=1e-5, rtol=1e-5), "nhwc path mismatch"

    print("KERNEL_OK")
</pallas_src>

<mosaic_0001>
module attributes {stable_mosaic.version = 11 : i64} {
  func.func @_transition_up_kernel(%arg0: i32, %arg1: i32, %arg2: memref<1x8x16x128xf32, #tpu.memory_space<vmem>>, %arg3: memref<1x1x16x128xf32, #tpu.memory_space<vmem>>, %arg4: memref<128x1152xf32, #tpu.memory_space<vmem>>, %arg5: memref<1x8x2x16x256xf32, #tpu.memory_space<vmem>>) attributes {dimension_semantics = [#tpu.dimension_semantics<parallel>, #tpu.dimension_semantics<parallel>], iteration_bounds = array<i64: 2, 2>, scalar_prefetch = 0 : i64, scratch_operands = 0 : i64, tpu.core_type = #tpu.core_type<tc>, window_params = [{transform_indices = @transform_0, window_bounds = array<i64: 1, 8, 16, 128>}, {transform_indices = @transform_1, window_bounds = array<i64: 1, 1, 16, 128>}, {pipeline_mode = #tpu.pipeline_mode<synchronous>, transform_indices = @transform_2, window_bounds = array<i64: 128, 1152>}, {transform_indices = @transform_3, window_bounds = array<i64: 1, 8, 2, 16, 256>}]} {
    %c1_i32 = arith.constant 1 : i32
    %0 = arith.addi %arg1, %c1_i32 : i32
    %c2_i32 = arith.constant 2 : i32
    %1 = arith.cmpi slt, %0, %c2_i32 : i32
    %2 = arith.extui %1 : i1 to i32
    %3 = arith.sitofp %2 : i32 to f32
    %c0 = arith.constant 0 : index
    %c0_0 = arith.constant 0 : index
    %c0_1 = arith.constant 0 : index
    %c0_2 = arith.constant 0 : index
    %4 = vector.load %arg3[%c0, %c0_0, %c0_1, %c0_2] : memref<1x1x16x128xf32, #tpu.memory_space<vmem>>, vector<1x1x16x128xf32>
    %5 = vector.shape_cast %4 : vector<1x1x16x128xf32> to vector<16x128xf32>
    %6 = vector.broadcast %3 : f32 to vector<16x128xf32>
    %7 = arith.mulf %5, %6 : vector<16x128xf32>
    %c0_3 = arith.constant 0 : index
    %c0_4 = arith.constant 0 : index
    %c0_5 = arith.constant 0 : index
    %c0_6 = arith.constant 0 : index
    %8 = vector.load %arg2[%c0_3, %c0_4, %c0_5, %c0_6] : memref<1x8x16x128xf32, #tpu.memory_space<vmem>>, vector<1x8x16x128xf32>
    %9 = vector.shape_cast %8 : vector<1x8x16x128xf32> to vector<8x16x128xf32>
    %10 = vector.shape_cast %7 : vector<16x128xf32> to vector<1x16x128xf32>
    %11 = tpu.concatenate %9, %10 in 0 : vector<8x16x128xf32>, vector<1x16x128xf32> -> vector<9x16x128xf32>
    %12 = vector.shape_cast %11 : vector<9x16x128xf32> to vector<144x128xf32>
    %c0_7 = arith.constant 0 : index
    %c0_8 = arith.constant 0 : index
    %13 = vector.load %arg4[%c0_7, %c0_8] : memref<128x1152xf32, #tpu.memory_space<vmem>>, vector<128x1152xf32>
    %cst = arith.constant dense<0.000000e+00> : vector<144x1152xf32>
    %14 = tpu.matmul %12, %13, %cst {dimension_numbers = #tpu.dot_dimension_numbers<[1], [0], [0], [1], [0, 0, 1, 1], [], []>} : vector<144x128xf32>, vector<128x1152xf32>, vector<144x1152xf32> -> vector<144x1152xf32>
    %cst_9 = arith.constant 0.000000e+00 : f32
    %15 = vector.broadcast %cst_9 : f32 to vector<8x1x128xf32>
    %16 = vector.extract_strided_slice %14 {offsets = [0, 512], sizes = [144, 128], strides = [1, 1]} : vector<144x1152xf32> to vector<144x128xf32>
    %17 = vector.shape_cast %16 : vector<144x128xf32> to vector<9x16x128xf32>
    %18 = vector.extract_strided_slice %17 {offsets = [0, 0, 0], sizes = [8, 16, 128], strides = [1, 1, 1]} : vector<9x16x128xf32> to vector<8x16x128xf32>
    %19 = vector.extract_strided_slice %14 {offsets = [0, 640], sizes = [144, 128], strides = [1, 1]} : vector<144x1152xf32> to vector<144x128xf32>
    %20 = vector.shape_cast %19 : vector<144x128xf32> to vector<9x16x128xf32>
    %21 = vector.extract_strided_slice %20 {offsets = [0, 0, 0], sizes = [8, 16, 128], strides = [1, 1, 1]} : vector<9x16x128xf32> to vector<8x16x128xf32>
    %22 = vector.extract_strided_slice %14 {offsets = [0, 384], sizes = [144, 128], strides = [1, 1]} : vector<144x1152xf32> to vector<144x128xf32>
    %23 = vector.shape_cast %22 : vector<144x128xf32> to vector<9x16x128xf32>
    %24 = vector.extract_strided_slice %23 {offsets = [0, 0, 0], sizes = [8, 16, 128], strides = [1, 1, 1]} : vector<9x16x128xf32> to vector<8x16x128xf32>
    %25 = vector.extract_strided_slice %24 {offsets = [0, 1, 0], sizes = [8, 15, 128], strides = [1, 1, 1]} : vector<8x16x128xf32> to vector<8x15x128xf32>
    %26 = tpu.concatenate %25, %15 in 1 : vector<8x15x128xf32>, vector<8x1x128xf32> -> vector<8x16x128xf32>
    %27 = arith.addf %21, %26 : vector<8x16x128xf32>
    %28 = vector.extract_strided_slice %14 {offsets = [0, 896], sizes = [144, 128], strides = [1, 1]} : vector<144x1152xf32> to vector<144x128xf32>
    %29 = vector.shape_cast %28 : vector<144x128xf32> to vector<9x16x128xf32>
    %30 = vector.extract_strided_slice %29 {offsets = [0, 0, 0], sizes = [8, 16, 128], strides = [1, 1, 1]} : vector<9x16x128xf32> to vector<8x16x128xf32>
    %31 = vector.extract_strided_slice %14 {offsets = [0, 128], sizes = [144, 128], strides = [1, 1]} : vector<144x1152xf32> to vector<144x128xf32>
    %32 = vector.shape_cast %31 : vector<144x128xf32> to vector<9x16x128xf32>
    %33 = vector.extract_strided_slice %32 {offsets = [1, 0, 0], sizes = [8, 16, 128], strides = [1, 1, 1]} : vector<9x16x128xf32> to vector<8x16x128xf32>
    %34 = arith.addf %30, %33 : vector<8x16x128xf32>
    %35 = vector.extract_strided_slice %14 {offsets = [0, 1024], sizes = [144, 128], strides = [1, 1]} : vector<144x1152xf32> to vector<144x128xf32>
    %36 = vector.shape_cast %35 : vector<144x128xf32> to vector<9x16x128xf32>
    %37 = vector.extract_strided_slice %36 {offsets = [0, 0, 0], sizes = [8, 16, 128], strides = [1, 1, 1]} : vector<9x16x128xf32> to vector<8x16x128xf32>
    %38 = vector.extract_strided_slice %14 {offsets = [0, 768], sizes = [144, 128], strides = [1, 1]} : vector<144x1152xf32> to vector<144x128xf32>
    %39 = vector.shape_cast %38 : vector<144x128xf32> to vector<9x16x128xf32>
    %40 = vector.extract_strided_slice %39 {offsets = [0, 0, 0], sizes = [8, 16, 128], strides = [1, 1, 1]} : vector<9x16x128xf32> to vector<8x16x128xf32>
    %41 = vector.extract_strided_slice %40 {offsets = [0, 1, 0], sizes = [8, 15, 128], strides = [1, 1, 1]} : vector<8x16x128xf32> to vector<8x15x128xf32>
    %42 = tpu.concatenate %41, %15 in 1 : vector<8x15x128xf32>, vector<8x1x128xf32> -> vector<8x16x128xf32>
    %43 = arith.addf %37, %42 : vector<8x16x128xf32>
    %44 = vector.extract_strided_slice %14 {offsets = [0, 256], sizes = [144, 128], strides = [1, 1]} : vector<144x1152xf32> to vector<144x128xf32>
    %45 = vector.shape_cast %44 : vector<144x128xf32> to vector<9x16x128xf32>
    %46 = vector.extract_strided_slice %45 {offsets = [1, 0, 0], sizes = [8, 16, 128], strides = [1, 1, 1]} : vector<9x16x128xf32> to vector<8x16x128xf32>
    %47 = arith.addf %43, %46 : vector<8x16x128xf32>
    %48 = vector.extract_strided_slice %14 {offsets = [0, 0], sizes = [144, 128], strides = [1, 1]} : vector<144x1152xf32> to vector<144x128xf32>
    %49 = vector.shape_cast %48 : vector<144x128xf32> to vector<9x16x128xf32>
    %50 = vector.extract_strided_slice %49 {offsets = [1, 0, 0], sizes = [8, 16, 128], strides = [1, 1, 1]} : vector<9x16x128xf32> to vector<8x16x128xf32>
    %51 = vector.extract_strided_slice %50 {offsets = [0, 1, 0], sizes = [8, 15, 128], strides = [1, 1, 1]} : vector<8x16x128xf32> to vector<8x15x128xf32>
    %52 = tpu.concatenate %51, %15 in 1 : vector<8x15x128xf32>, vector<8x1x128xf32> -> vector<8x16x128xf32>
    %53 = arith.addf %47, %52 : vector<8x16x128xf32>
    %c0_10 = arith.constant 0 : index
    %c0_11 = arith.constant 0 : index
    %c0_12 = arith.constant 0 : index
    %c0_13 = arith.constant 0 : index
    %c0_14 = arith.constant 0 : index
    %54 = vector.load %arg5[%c0_10, %c0_11, %c0_12, %c0_13, %c0_14] : memref<1x8x2x16x256xf32, #tpu.memory_space<vmem>>, vector<1x8x1x16x128xf32>
    %55 = vector.shape_cast %54 : vector<1x8x1x16x128xf32> to vector<8x16x128xf32>
    %56 = vector.shape_cast %18 : vector<8x16x128xf32> to vector<1x8x1x16x128xf32>
    tpu.vector_store %arg5[%c0_10, %c0_11, %c0_12, %c0_13, %c0_14], %56 {strides = array<i32>} : memref<1x8x2x16x256xf32, #tpu.memory_space<vmem>>, vector<1x8x1x16x128xf32>,
    %c0_15 = arith.constant 0 : index
    %c0_16 = arith.constant 0 : index
    %c0_17 = arith.constant 0 : index
    %c0_18 = arith.constant 0 : index
    %c128 = arith.constant 128 : index
    %57 = vector.load %arg5[%c0_15, %c0_16, %c0_17, %c0_18, %c128] : memref<1x8x2x16x256xf32, #tpu.memory_space<vmem>>, vector<1x8x1x16x128xf32>
    %58 = vector.shape_cast %57 : vector<1x8x1x16x128xf32> to vector<8x16x128xf32>
    %59 = vector.shape_cast %27 : vector<8x16x128xf32> to vector<1x8x1x16x128xf32>
    tpu.vector_store %arg5[%c0_15, %c0_16, %c0_17, %c0_18, %c128], %59 {strides = array<i32>} : memref<1x8x2x16x256xf32, #tpu.memory_space<vmem>>, vector<1x8x1x16x128xf32>,
    %c0_19 = arith.constant 0 : index
    %c0_20 = arith.constant 0 : index
    %c1 = arith.constant 1 : index
    %c0_21 = arith.constant 0 : index
    %c0_22 = arith.constant 0 : index
    %60 = vector.load %arg5[%c0_19, %c0_20, %c1, %c0_21, %c0_22] : memref<1x8x2x16x256xf32, #tpu.memory_space<vmem>>, vector<1x8x1x16x128xf32>
    %61 = vector.shape_cast %60 : vector<1x8x1x16x128xf32> to vector<8x16x128xf32>
    %62 = vector.shape_cast %34 : vector<8x16x128xf32> to vector<1x8x1x16x128xf32>
    tpu.vector_store %arg5[%c0_19, %c0_20, %c1, %c0_21, %c0_22], %62 {strides = array<i32>} : memref<1x8x2x16x256xf32, #tpu.memory_space<vmem>>, vector<1x8x1x16x128xf32>,
    %c0_23 = arith.constant 0 : index
    %c0_24 = arith.constant 0 : index
    %c1_25 = arith.constant 1 : index
    %c0_26 = arith.constant 0 : index
    %c128_27 = arith.constant 128 : index
    %63 = vector.load %arg5[%c0_23, %c0_24, %c1_25, %c0_26, %c128_27] : memref<1x8x2x16x256xf32, #tpu.memory_space<vmem>>, vector<1x8x1x16x128xf32>
    %64 = vector.shape_cast %63 : vector<1x8x1x16x128xf32> to vector<8x16x128xf32>
    %65 = vector.shape_cast %53 : vector<8x16x128xf32> to vector<1x8x1x16x128xf32>
    tpu.vector_store %arg5[%c0_23, %c0_24, %c1_25, %c0_26, %c128_27], %65 {strides = array<i32>} : memref<1x8x2x16x256xf32, #tpu.memory_space<vmem>>, vector<1x8x1x16x128xf32>,
    return
  }
  func.func @transform_0(%arg0: i32, %arg1: i32) -> (i32, i32, i32, i32) {
    %c0_i32 = arith.constant 0 : i32
    %c0_i32_0 = arith.constant 0 : i32
    %c0_i32_1 = arith.constant 0 : i32
    return %arg0, %arg1, %c0_i32, %c0_i32_0 : i32, i32, i32, i32
  }
  func.func @transform_1(%arg0: i32, %arg1: i32) -> (i32, i32, i32, i32) {
    %c1_i32 = arith.constant 1 : i32
    %0 = arith.addi %arg1, %c1_i32 : i32
    %c8_i32 = arith.constant 8 : i32
    %1 = arith.muli %0, %c8_i32 : i32
    %c15_i32 = arith.constant 15 : i32
    %2 = arith.minsi %1, %c15_i32 : i32
    %c0_i32 = arith.constant 0 : i32
    %c0_i32_0 = arith.constant 0 : i32
    %c0_i32_1 = arith.constant 0 : i32
    return %arg0, %2, %c0_i32, %c0_i32_0 : i32, i32, i32, i32
  }
  func.func @transform_2(%arg0: i32, %arg1: i32) -> (i32, i32) {
    %c0_i32 = arith.constant 0 : i32
    %c0_i32_0 = arith.constant 0 : i32
    %c0_i32_1 = arith.constant 0 : i32
    return %c0_i32, %c0_i32_0 : i32, i32
  }
  func.func @transform_3(%arg0: i32, %arg1: i32) -> (i32, i32, i32, i32, i32) {
    %c0_i32 = arith.constant 0 : i32
    %c0_i32_0 = arith.constant 0 : i32
    %c0_i32_1 = arith.constant 0 : i32
    %c0_i32_2 = arith.constant 0 : i32
    return %arg0, %arg1, %c0_i32, %c0_i32_0, %c0_i32_1 : i32, i32, i32, i32, i32
  }
}

</mosaic_0001>

<llo_original>
// kernel: tpu_custom_call.1
$region0: #{tpu_custom_call.1}
  #allocation0 [shape = 'u32[]', space=smem, size = 0x4, offset = 0x4, fixed_abs, tag = 'smem constant byte address 0x4 - core index']
  #allocation1 [shape = 'u32[144,128]{1,0:T(1,128)}', space=vmem, size = 0x12000, scoped, tag = 'internal scratch']
  %s0 = inlined_call_operand.hbm [shape: f32[2,16,16,128], index: 0, kind: input, shape index: {}]
  %s1 = inlined_call_operand.hbm [shape: f32[2,16,16,128], index: 1, kind: input, shape index: {}]
  %s2 = inlined_call_operand.hbm [shape: f32[128,1152], index: 2, kind: input, shape index: {}]
  %s3 = inlined_call_operand.hbm [shape: f32[2,16,2,16,256], index: 3, kind: output, shape index: {}]
  %s4 = sld [smem:[#allocation0]]
  $region57: #{tpu_custom_call.1} parent=0
    _
  %s6 = ssub.s32 1, %s4
  %s7 = scalar_select 0, %s6, %s4
  $region1: #{tpu_custom_call.1} parent=0
    #allocation2 [shape = 'u8[131072]{0}', space=vmem, size = 0x20000, scoped, tag = 'input window, operand 0']
    #allocation3 [shape = 's32[2]{0}', space=sflag, size = 0x8, scoped, tag = 'scoped memory for tpu_custom_call.1']
    #allocation4 [shape = 's32[2]{0}', space=sflag, size = 0x8, scoped, tag = 'scoped memory for tpu_custom_call.1']
    #allocation5 [shape = 'u8[16384]{0}', space=vmem, size = 0x4000, scoped, tag = 'input window, operand 1']
    #allocation6 [shape = 's32[2]{0}', space=sflag, size = 0x8, scoped, tag = 'scoped memory for tpu_custom_call.1']
    #allocation7 [shape = 'u8[589824]{0}', space=vmem, size = 0x90000, scoped, tag = 'input window, operand 2, single buffered']
    #allocation8 [shape = 'u8[524288]{0}', space=vmem, size = 0x80000, scoped, tag = 'output window, operand 0']
    %8 = vsyncpa [#allocation3], 0
    %s9 = scalar_lea.sflag [#allocation3], 1
    %10 = vsyncpa %s9, 0
    %11 = vsyncpa [#allocation6], 0
    %s12 = scalar_lea.sflag [#allocation6], 1
    %13 = vsyncpa %s12, 0
    %14 = vsyncpa [#allocation4], 0
    %s15 = scalar_lea.sflag [#allocation4], 1
    %16 = vsyncpa %s15, 0
    loop: start=0, step=1, limit=6
    $region2: #{tpu_custom_call.1} parent=1 // loop_pre_header
      _
    $region3: #{tpu_custom_call.1} parent=1 // loop_header
      %s18 = sphi 0, %s22
      %p19 = scmp.ge.s32.totalorder %s18, 6
      %s25 = sphi 0, %s37
      %s26 = sphi 0, %s33
      %s27 = sphi 0, %s25
      %s28 = sphi 0, %s26
      %s29 = sphi 0, %s27
      %s30 = sphi 0, %s28
      %s42 = sphi 0, %s44
      %s45 = sphi 0, %s42
      %s46 = sphi 0, %s45
      %s62 = sphi 0, %s46
      %s78 = sphi 0, %s80
      %s81 = sphi 0, %s78
      %s82 = sphi 0, %s81
      %s98 = sphi 0, %s82
      %s102 = sphi 0, %s102
      %s104 = sphi 0, %s102
      %s105 = sphi 0, %s104
      %s119 = sphi 0, %s105
      %s127 = sphi 0, %s129
      %s130 = sphi 0, %s127
      %s131 = sphi 0, %s130
      %s147 = sphi 0, %s131
    $region4: #{tpu_custom_call.1} parent=1 // loop_header_branch
      %21 = sbr.rel (%p19) target = $region8
    $region5: #{tpu_custom_call.1} parent=1 // loop_body
      %s23 = ssub.s32 %s18, 1
      %s24 = ssub.s32 %s18, 2
      %s31 = sadd.s32 1, %s26
      %p32 = scmp.ge.s32.totalorder %s31, 2
      %s33 = scalar_select %p32, 0, %s31
      %s34 = sadd.s32 1, %s25
      %s35 = scalar_select %p32, %s34, %s25
      %p36 = scmp.ge.s32.totalorder %s35, 2
      %s37 = scalar_select %p36, 0, %s35
      %s38 = ssub.s32 %s25, %s37
      %s39 = ssub.s32 %s26, %s33
      %s40 = sor.u32 %s38, %s39
      %p41 = scmp.eq.s32.totalorder %s40, 0
      %s43 = sadd.s32 %s42, 1
      %s44 = scalar_select %p41, %s42, %s43
      %p47 = pneg %p41
      %p48 = scmp.eq.s32.totalorder %s18, 3
      %p49 = por %p47, %p48
      %p50 = scmp.ne.s32.totalorder %s42, %s45
      %p51 = scmp.eq.s32.totalorder %s18, 0
      %p52 = por %p50, %p51
      %p53 = scmp.ne.s32.totalorder %s42, %s45
      %p54 = scmp.eq.s32.totalorder %s23, 3
      %p55 = por %p53, %p54
      %p56 = scmp.ne.s32.totalorder %s45, %s46
      %p57 = scmp.eq.s32.totalorder %s23, 0
      %p58 = por %p56, %p57
      %p59 = scmp.ne.s32.totalorder %s45, %s46
      %p60 = scmp.eq.s32.totalorder %s24, 3
      %p61 = por %p59, %p60
      %p63 = scmp.ne.s32.totalorder %s46, %s62
      %p64 = scmp.eq.s32.totalorder %s24, 0
      %p65 = por %p63, %p64
      %s66 = sadd.s32 %s26, 1
      %s67 = smul.u32 %s66, 8
      %p68 = scmp.lt.s32.totalorder %s67, 15
      %s69 = scalar_select %p68, %s67, 15
      %s70 = sadd.s32 %s33, 1
      %s71 = smul.u32 %s70, 8
      %p72 = scmp.lt.s32.totalorder %s71, 15
      %s73 = scalar_select %p72, %s71, 15
      %s74 = ssub.s32 %s25, %s37
      %s75 = ssub.s32 %s69, %s73
      %s76 = sor.u32 %s74, %s75
      %p77 = scmp.eq.s32.totalorder %s76, 0
      %s79 = sadd.s32 %s78, 1
      %s80 = scalar_select %p77, %s78, %s79
      %p83 = pneg %p77
      %p84 = scmp.eq.s32.totalorder %s18, 3
      %p85 = por %p83, %p84
      %p86 = scmp.ne.s32.totalorder %s78, %s81
      %p87 = scmp.eq.s32.totalorder %s18, 0
      %p88 = por %p86, %p87
      %p89 = scmp.ne.s32.totalorder %s78, %s81
      %p90 = scmp.eq.s32.totalorder %s23, 3
      %p91 = por %p89, %p90
      %p92 = scmp.ne.s32.totalorder %s81, %s82
      %p93 = scmp.eq.s32.totalorder %s23, 0
      %p94 = por %p92, %p93
      %p95 = scmp.ne.s32.totalorder %s81, %s82
      %p96 = scmp.eq.s32.totalorder %s24, 3
      %p97 = por %p95, %p96
      %p99 = scmp.ne.s32.totalorder %s82, %s98
      %p100 = scmp.eq.s32.totalorder %s24, 0
      %p101 = por %p99, %p100
      %s103 = sadd.s32 %s102, 1
      %p106 = scmp.eq.s32.totalorder %s18, 3
      %p107 = scmp.ne.s32.totalorder %s102, %s104
      %p108 = scmp.eq.s32.totalorder %s18, 0
      %p109 = por %p107, %p108
      %p110 = scmp.ne.s32.totalorder %s102, %s104
      %p111 = scmp.eq.s32.totalorder %s23, 3
      %p112 = por %p110, %p111
      %p113 = scmp.ne.s32.totalorder %s104, %s105
      %p114 = scmp.eq.s32.totalorder %s23, 0
      %p115 = por %p113, %p114
      %p116 = scmp.ne.s32.totalorder %s104, %s105
      %p117 = scmp.eq.s32.totalorder %s24, 3
      %p118 = por %p116, %p117
      %p120 = scmp.ne.s32.totalorder %s105, %s119
      %p121 = scmp.eq.s32.totalorder %s24, 0
      %p122 = por %p120, %p121
      %s123 = ssub.s32 %s25, %s37
      %s124 = ssub.s32 %s26, %s33
      %s125 = sor.u32 %s123, %s124
      %p126 = scmp.eq.s32.totalorder %s125, 0
      %s128 = sadd.s32 %s127, 1
      %s129 = scalar_select %p126, %s127, %s128
      %p132 = pneg %p126
      %p133 = scmp.eq.s32.totalorder %s18, 3
      %p134 = por %p132, %p133
      %p135 = scmp.ne.s32.totalorder %s127, %s130
      %p136 = scmp.eq.s32.totalorder %s18, 0
      %p137 = por %p135, %p136
      %p138 = scmp.ne.s32.totalorder %s127, %s130
      %p139 = scmp.eq.s32.totalorder %s23, 3
      %p140 = por %p138, %p139
      %p141 = scmp.ne.s32.totalorder %s130, %s131
      %p142 = scmp.eq.s32.totalorder %s23, 0
      %p143 = por %p141, %p142
      %p144 = scmp.ne.s32.totalorder %s130, %s131
      %p145 = scmp.eq.s32.totalorder %s24, 3
      %p146 = por %p144, %p145
      %p148 = scmp.ne.s32.totalorder %s131, %s147
      %p149 = scmp.eq.s32.totalorder %s24, 0
      %p150 = por %p148, %p149
      %p151 = scmp.le.s32.totalorder 1, %s18
      %p152 = scmp.lt.s32.totalorder %s18, 5
      %p153 = pnand %p151, %p152
      %p154 = pneg %p153
      // Predicated region
      $region9: #{tpu_custom_call.1} parent=5 // pred_check
        _
      $region10: #{tpu_custom_call.1} parent=5 // pred_check_branch
        %156 = sbr.rel (%p153) target = $region12
      $region11: #{tpu_custom_call.1} parent=5 // pred_region
        %s157 = ssub.s32 %s18, 1
        // Predicated region
        $region13: #{tpu_custom_call.1} parent=11 // pred_check
          %p158 = pneg %p115
        $region14: #{tpu_custom_call.1} parent=11 // pred_check_branch
          %160 = sbr.rel (%p158) target = $region16
        $region15: #{tpu_custom_call.1} parent=11 // pred_region
          %s162 = ssub.s32 18432, 18432
          %163 = vsyncadd [#allocation6], %s162
          %s164 = sshll.u32 [#allocation7], 4
          %s165 = int_to_ptr.vmem [resolvable:$true] %s164
          %170 = dma.hbm_to_vmem [thread:$0]  %s2, 18432, %s165, [#allocation6], 1152, 1152, 72
        $region16: #{tpu_custom_call.1} parent=11 // pred_fallthru
          _
      $region12: #{tpu_custom_call.1} parent=5 // pred_fallthru
        _
      %p171 = scmp.lt.s32.totalorder %s18, 4
      // Predicated region
      $region17: #{tpu_custom_call.1} parent=5 // pred_check
        %p172 = pneg %p171
      $region18: #{tpu_custom_call.1} parent=5 // pred_check_branch
        %174 = sbr.rel (%p172) target = $region20
      $region19: #{tpu_custom_call.1} parent=5 // pred_region
        // Predicated region
        $region21: #{tpu_custom_call.1} parent=19 // pred_check
          %p175 = pneg %p52
        $region22: #{tpu_custom_call.1} parent=19 // pred_check_branch
          %177 = sbr.rel (%p175) target = $region24
        $region23: #{tpu_custom_call.1} parent=19 // pred_region
          %s178 = sand.u32 %s42, 1
          %s179 = scalar_lea.sflag [#allocation3], %s178
          %s180 = sand.u32 %s42, 1
          %s181 = smul.addr %s180, 128
          %s182 = scalar_lea.vmem [#allocation2], %s181
          %s183 = smul.u32 8, %s26
          %s185 = ssub.s32 2048, 2048
          %186 = vsyncadd %s179, %s185
          %s187 = smul.addr %s183, 2
          %s188 = smul.addr %s25, 32
          %s189 = sadd.s32 %s187, %s188
          %s190 = smul.addr %s189, 128
          %s191 = scalar_lea.hbm %s0, %s190
          %s192 = sshll.u32 %s182, 4
          %s193 = int_to_ptr.vmem [resolvable:$true] %s192
          %198 = dma.hbm_to_vmem [thread:$0]  %s191, 2048, %s193, %s179, 128, 128, 8
        $region24: #{tpu_custom_call.1} parent=19 // pred_fallthru
          _
        // Predicated region
        $region25: #{tpu_custom_call.1} parent=19 // pred_check
          %p199 = pneg %p88
        $region26: #{tpu_custom_call.1} parent=19 // pred_check_branch
          %201 = sbr.rel (%p199) target = $region28
        $region27: #{tpu_custom_call.1} parent=19 // pred_region
          %s202 = sand.u32 %s18, 1
          %s203 = scalar_lea.sflag [#allocation6], %s202
          %s204 = sand.u32 %s78, 1
          %s205 = smul.addr %s204, 16
          %s206 = scalar_lea.vmem [#allocation5], %s205
          %s207 = sadd.s32 %s26, 1
          %s208 = smul.u32 %s207, 8
          %p209 = scmp.lt.s32.totalorder %s208, 15
          %s210 = scalar_select %p209, %s208, 15
          %s212 = ssub.s32 256, 256
          %213 = vsyncadd %s203, %s212
          %s214 = smul.addr %s210, 2
          %s215 = smul.addr %s25, 32
          %s216 = sadd.s32 %s214, %s215
          %s217 = smul.addr %s216, 128
          %s218 = scalar_lea.hbm %s1, %s217
          %s219 = sshll.u32 %s206, 4
          %s220 = int_to_ptr.vmem [resolvable:$true] %s219
          %225 = dma.hbm_to_vmem [thread:$0]  %s218, 256, %s220, %s203, 128, 128, 8
        $region28: #{tpu_custom_call.1} parent=19 // pred_fallthru
          _
      $region20: #{tpu_custom_call.1} parent=5 // pred_fallthru
        _
      %p226 = scmp.le.s32.totalorder 1, %s18
      %p227 = scmp.lt.s32.totalorder %s18, 5
      %p228 = pnand %p226, %p227
      %p229 = pneg %p228
      // Predicated region
      $region29: #{tpu_custom_call.1} parent=5 // pred_check
        _
      $region30: #{tpu_custom_call.1} parent=5 // pred_check_branch
        %231 = sbr.rel (%p228) target = $region32
      $region31: #{tpu_custom_call.1} parent=5 // pred_region
        %s232 = ssub.s32 %s18, 1
        %s233 = sand.u32 %s45, 1
        %s234 = scalar_lea.sflag [#allocation3], %s233
        %s235 = sand.u32 %s45, 1
        %s236 = smul.addr %s235, 128
        %s237 = scalar_lea.vmem [#allocation2], %s236
        // Predicated region
        $region33: #{tpu_custom_call.1} parent=31 // pred_check
          %p238 = pneg %p58
        $region34: #{tpu_custom_call.1} parent=31 // pred_check_branch
          %240 = sbr.rel (%p238) target = $region36
        $region35: #{tpu_custom_call.1} parent=31 // pred_region
          %241 = dma.done %s234, 2048
        $region36: #{tpu_custom_call.1} parent=31 // pred_fallthru
          _
        %s242 = sand.u32 %s23, 1
        %s243 = scalar_lea.sflag [#allocation6], %s242
        %s244 = sand.u32 %s81, 1
        %s245 = smul.addr %s244, 16
        %s246 = scalar_lea.vmem [#allocation5], %s245
        // Predicated region
        $region37: #{tpu_custom_call.1} parent=31 // pred_check
          %p247 = pneg %p94
        $region38: #{tpu_custom_call.1} parent=31 // pred_check_branch
          %249 = sbr.rel (%p247) target = $region40
        $region39: #{tpu_custom_call.1} parent=31 // pred_region
          %250 = dma.done %s243, 256
        $region40: #{tpu_custom_call.1} parent=31 // pred_fallthru
          _
        // Predicated region
        $region41: #{tpu_custom_call.1} parent=31 // pred_check
          %p251 = pneg %p115
        $region42: #{tpu_custom_call.1} parent=31 // pred_check_branch
          %253 = sbr.rel (%p251) target = $region44
        $region43: #{tpu_custom_call.1} parent=31 // pred_region
          %254 = dma.done [#allocation6], 18432
        $region44: #{tpu_custom_call.1} parent=31 // pred_fallthru
          _
        %s255 = sand.u32 %s45, 1
        %s256 = scalar_lea.sflag [#allocation3], %s255
        %s257 = sand.u32 %s45, 1
        %s258 = smul.addr %s257, 128
        %s259 = scalar_lea.vmem [#allocation2], %s258
        %p260 = pneg %p58
        %p261 = pneg %p55
        %s262 = sand.u32 %s23, 1
        %s263 = scalar_lea.sflag [#allocation6], %s262
        %s264 = sand.u32 %s81, 1
        %s265 = smul.addr %s264, 16
        %s266 = scalar_lea.vmem [#allocation5], %s265
        %p267 = pneg %p94
        %p268 = pneg %p91
        %p269 = pneg %p115
        %p270 = pneg %p112
        %p271 = pneg %p143
        %p272 = pneg %p140
        %s273 = sand.u32 %s130, 1
        %s274 = scalar_lea.sflag [#allocation4], %s273
        %s275 = sand.u32 %s130, 1
        %s276 = smul.addr %s275, 512
        %s277 = scalar_lea.vmem [#allocation8], %s276
        %s278 = smul.u32 8, %s28
        %s279 = sadd.s32 %s28, 1
        %s280 = smul.u32 %s279, 8
        %p281 = scmp.lt.s32.totalorder %s280, 15
        %s282 = scalar_select %p281, %s280, 15
        %s283 = smul.u32 8, %s28
        %s284 = sadd.s32 %s28, 1
        %p285 = scmp.lt.s32.totalorder %s284, 2
        %s286 = scalar_select %p285, 1, 0
        %s287 = scvt.s32.f32 %s286
        %v288 = vld [vmem:[%s246] sm:$0xff]
        %v289 = vld [vmem:[%s246 + $0x8] sm:$0xff]
        %v290 = vstv %s287
        %v291 = vmul.f32 %v288, %v290
        %v292 = vmul.f32 %v289, %v290
        %v293 = vld [vmem:[%s237] sm:$0xff]
        %v294 = vld [vmem:[%s237 + $0x8] sm:$0xff]
        %v295 = vld [vmem:[%s237 + $0x10] sm:$0xff]
        %v296 = vld [vmem:[%s237 + $0x18] sm:$0xff]
        %v297 = vld [vmem:[%s237 + $0x20] sm:$0xff]
        %v298 = vld [vmem:[%s237 + $0x28] sm:$0xff]
        %v299 = vld [vmem:[%s237 + $0x30] sm:$0xff]
        %v300 = vld [vmem:[%s237 + $0x38] sm:$0xff]
        %v301 = vld [vmem:[%s237 + $0x40] sm:$0xff]
        %v302 = vld [vmem:[%s237 + $0x48] sm:$0xff]
        %v303 = vld [vmem:[%s237 + $0x50] sm:$0xff]
        %v304 = vld [vmem:[%s237 + $0x58] sm:$0xff]
        %v305 = vld [vmem:[%s237 + $0x60] sm:$0xff]
        %v306 = vld [vmem:[%s237 + $0x68] sm:$0xff]
        %v307 = vld [vmem:[%s237 + $0x70] sm:$0xff]
        %v308 = vld [vmem:[%s237 + $0x78] sm:$0xff]
        %v309 = vld [vmem:[#allocation7] sm:$0xff]
        %v310 = vld [vmem:[#allocation7 + $0x8] sm:$0xff]
        %v311 = vld [vmem:[#allocation7 + $0x10] sm:$0xff]
        %v312 = vld [vmem:[#allocation7 + $0x18] sm:$0xff]
        %v313 = vld [vmem:[#allocation7 + $0x20] sm:$0xff]
        %v314 = vld [vmem:[#allocation7 + $0x28] sm:$0xff]
        %v315 = vld [vmem:[#allocation7 + $0x30] sm:$0xff]
        %v316 = vld [vmem:[#allocation7 + $0x38] sm:$0xff]
        %v317 = vld [vmem:[#allocation7 + $0x40] sm:$0xff]
        %v318 = vld [vmem:[#allocation7 + $0x48] sm:$0xff]
        %v319 = vld [vmem:[#allocation7 + $0x50] sm:$0xff]
        %v320 = vld [vmem:[#allocation7 + $0x58] sm:$0xff]
        %v321 = vld [vmem:[#allocation7 + $0x60] sm:$0xff]
        %v322 = vld [vmem:[#allocation7 + $0x68] sm:$0xff]
        %v323 = vld [vmem:[#allocation7 + $0x70] sm:$0xff]
        %v324 = vld [vmem:[#allocation7 + $0x78] sm:$0xff]
        %v325 = vld [vmem:[#allocation7 + $0x80] sm:$0xff]
        %v326 = vld [vmem:[#allocation7 + $0x88] sm:$0xff]
        %v327 = vld [vmem:[#allocation7 + $0x90] sm:$0xff]
        %v328 = vld [vmem:[#allocation7 + $0x98] sm:$0xff]
        %v329 = vld [vmem:[#allocation7 + $0xa0] sm:$0xff]
        %v330 = vld [vmem:[#allocation7 + $0xa8] sm:$0xff]
        %v331 = vld [vmem:[#allocation7 + $0xb0] sm:$0xff]
        %v332 = vld [vmem:[#allocation7 + $0xb8] sm:$0xff]
        %v333 = vld [vmem:[#allocation7 + $0xc0] sm:$0xff]
        %v334 = vld [vmem:[#allocation7 + $0xc8] sm:$0xff]
        %v335 = vld [vmem:[#allocation7 + $0xd0] sm:$0xff]
        %v336 = vld [vmem:[#allocation7 + $0xd8] sm:$0xff]
        %v337 = vld [vmem:[#allocation7 + $0xe0] sm:$0xff]
        %v338 = vld [vmem:[#allocation7 + $0xe8] sm:$0xff]
        %v339 = vld [vmem:[#allocation7 + $0xf0] sm:$0xff]
        %v340 = vld [vmem:[#allocation7 + $0xf8] sm:$0xff]
        %v341 = vld [vmem:[#allocation7 + $0x100] sm:$0xff]
        %v342 = vld [vmem:[#allocation7 + $0x108] sm:$0xff]
        %v343 = vld [vmem:[#allocation7 + $0x110] sm:$0xff]
        %v344 = vld [vmem:[#allocation7 + $0x118] sm:$0xff]
        %v345 = vld [vmem:[#allocation7 + $0x120] sm:$0xff]
        %v346 = vld [vmem:[#allocation7 + $0x128] sm:$0xff]
        %v347 = vld [vmem:[#allocation7 + $0x130] sm:$0xff]
        %v348 = vld [vmem:[#allocation7 + $0x138] sm:$0xff]
        %v349 = vld [vmem:[#allocation7 + $0x140] sm:$0xff]
        %v350 = vld [vmem:[#allocation7 + $0x148] sm:$0xff]
        %v351 = vld [vmem:[#allocation7 + $0x150] sm:$0xff]
        %v352 = vld [vmem:[#allocation7 + $0x158] sm:$0xff]
        %v353 = vld [vmem:[#allocation7 + $0x160] sm:$0xff]
        %v354 = vld [vmem:[#allocation7 + $0x168] sm:$0xff]
        %v355 = vld [vmem:[#allocation7 + $0x170] sm:$0xff]
        %v356 = vld [vmem:[#allocation7 + $0x178] sm:$0xff]
        %v357 = vld [vmem:[#allocation7 + $0x180] sm:$0xff]
        %v358 = vld [vmem:[#allocation7 + $0x188] sm:$0xff]
        %v359 = vld [vmem:[#allocation7 + $0x190] sm:$0xff]
        %v360 = vld [vmem:[#allocation7 + $0x198] sm:$0xff]
        %v361 = vld [vmem:[#allocation7 + $0x1a0] sm:$0xff]
        %v362 = vld [vmem:[#allocation7 + $0x1a8] sm:$0xff]
        %v363 = vld [vmem:[#allocation7 + $0x1b0] sm:$0xff]
        %v364 = vld [vmem:[#allocation7 + $0x1b8] sm:$0xff]
        %v365 = vld [vmem:[#allocation7 + $0x1c0] sm:$0xff]
        %v366 = vld [vmem:[#allocation7 + $0x1c8] sm:$0xff]
        %v367 = vld [vmem:[#allocation7 + $0x1d0] sm:$0xff]
        %v368 = vld [vmem:[#allocation7 + $0x1d8] sm:$0xff]
        %v369 = vld [vmem:[#allocation7 + $0x1e0] sm:$0xff]
        %v370 = vld [vmem:[#allocation7 + $0x1e8] sm:$0xff]
        %v371 = vld [vmem:[#allocation7 + $0x1f0] sm:$0xff]
        %v372 = vld [vmem:[#allocation7 + $0x1f8] sm:$0xff]
        %v373 = vld [vmem:[#allocation7 + $0x200] sm:$0xff]
        %v374 = vld [vmem:[#allocation7 + $0x208] sm:$0xff]
        %v375 = vld [vmem:[#allocation7 + $0x210] sm:$0xff]
        %v376 = vld [vmem:[#allocation7 + $0x218] sm:$0xff]
        %v377 = vld [vmem:[#allocation7 + $0x220] sm:$0xff]
        %v378 = vld [vmem:[#allocation7 + $0x228] sm:$0xff]
        %v379 = vld [vmem:[#allocation7 + $0x230] sm:$0xff]
        %v380 = vld [vmem:[#allocation7 + $0x238] sm:$0xff]
        %v381 = vld [vmem:[#allocation7 + $0x240] sm:$0xff]
        %v382 = vld [vmem:[#allocation7 + $0x248] sm:$0xff]
        %v383 = vld [vmem:[#allocation7 + $0x250] sm:$0xff]
        %v384 = vld [vmem:[#allocation7 + $0x258] sm:$0xff]
        %v385 = vld [vmem:[#allocation7 + $0x260] sm:$0xff]
        %v386 = vld [vmem:[#allocation7 + $0x268] sm:$0xff]
        %v387 = vld [vmem:[#allocation7 + $0x270] sm:$0xff]
        %v388 = vld [vmem:[#allocation7 + $0x278] sm:$0xff]
        %v389 = vld [vmem:[#allocation7 + $0x280] sm:$0xff]
        %v390 = vld [vmem:[#allocation7 + $0x288] sm:$0xff]
        %v391 = vld [vmem:[#allocation7 + $0x290] sm:$0xff]
        %v392 = vld [vmem:[#allocation7 + $0x298] sm:$0xff]
        %v393 = vld [vmem:[#allocation7 + $0x2a0] sm:$0xff]
        %v394 = vld [vmem:[#allocation7 + $0x2a8] sm:$0xff]
        %v395 = vld [vmem:[#allocation7 + $0x2b0] sm:$0xff]
        %v396 = vld [vmem:[#allocation7 + $0x2b8] sm:$0xff]
        %v397 = vld [vmem:[#allocation7 + $0x2c0] sm:$0xff]
        %v398 = vld [vmem:[#allocation7 + $0x2c8] sm:$0xff]
        %v399 = vld [vmem:[#allocation7 + $0x2d0] sm:$0xff]
        %v400 = vld [vmem:[#allocation7 + $0x2d8] sm:$0xff]
        %v401 = vld [vmem:[#allocation7 + $0x2e0] sm:$0xff]
        %v402 = vld [vmem:[#allocation7 + $0x2e8] sm:$0xff]
        %v403 = vld [vmem:[#allocation7 + $0x2f0] sm:$0xff]
        %v404 = vld [vmem:[#allocation7 + $0x2f8] sm:$0xff]
        %v405 = vld [vmem:[#allocation7 + $0x300] sm:$0xff]
        %v406 = vld [vmem:[#allocation7 + $0x308] sm:$0xff]
        %v407 = vld [vmem:[#allocation7 + $0x310] sm:$0xff]
        %v408 = vld [vmem:[#allocation7 + $0x318] sm:$0xff]
        %v409 = vld [vmem:[#allocation7 + $0x320] sm:$0xff]
        %v410 = vld [vmem:[#allocation7 + $0x328] sm:$0xff]
        %v411 = vld [vmem:[#allocation7 + $0x330] sm:$0xff]
        %v412 = vld [vmem:[#allocation7 + $0x338] sm:$0xff]
        %v413 = vld [vmem:[#allocation7 + $0x340] sm:$0xff]
        %v414 = vld [vmem:[#allocation7 + $0x348] sm:$0xff]
        %v415 = vld [vmem:[#allocation7 + $0x350] sm:$0xff]
        %v416 = vld [vmem:[#allocation7 + $0x358] sm:$0xff]
        %v417 = vld [vmem:[#allocation7 + $0x360] sm:$0xff]
        %v418 = vld [vmem:[#allocation7 + $0x368] sm:$0xff]
        %v419 = vld [vmem:[#allocation7 + $0x370] sm:$0xff]
        %v420 = vld [vmem:[#allocation7 + $0x378] sm:$0xff]
        %v421 = vld [vmem:[#allocation7 + $0x380] sm:$0xff]
        %v422 = vld [vmem:[#allocation7 + $0x388] sm:$0xff]
        %v423 = vld [vmem:[#allocation7 + $0x390] sm:$0xff]
        %v424 = vld [vmem:[#allocation7 + $0x398] sm:$0xff]
        %v425 = vld [vmem:[#allocation7 + $0x3a0] sm:$0xff]
        %v426 = vld [vmem:[#allocation7 + $0x3a8] sm:$0xff]
        %v427 = vld [vmem:[#allocation7 + $0x3b0] sm:$0xff]
        %v428 = vld [vmem:[#allocation7 + $0x3b8] sm:$0xff]
        %v429 = vld [vmem:[#allocation7 + $0x3c0] sm:$0xff]
        %v430 = vld [vmem:[#allocation7 + $0x3c8] sm:$0xff]
        %v431 = vld [vmem:[#allocation7 + $0x3d0] sm:$0xff]
        %v432 = vld [vmem:[#allocation7 + $0x3d8] sm:$0xff]
        %v433 = vld [vmem:[#allocation7 + $0x3e0] sm:$0xff]
        %v434 = vld [vmem:[#allocation7 + $0x3e8] sm:$0xff]
        %v435 = vld [vmem:[#allocation7 + $0x3f0] sm:$0xff]
        %v436 = vld [vmem:[#allocation7 + $0x3f8] sm:$0xff]
        %v437 = vld [vmem:[#allocation7 + $0x400] sm:$0xff]
        %v438 = vld [vmem:[#allocation7 + $0x408] sm:$0xff]
        %v439 = vld [vmem:[#allocation7 + $0x410] sm:$0xff]
        %v440 = vld [vmem:[#allocation7 + $0x418] sm:$0xff]
        %v441 = vld [vmem:[#allocation7 + $0x420] sm:$0xff]
        %v442 = vld [vmem:[#allocation7 + $0x428] sm:$0xff]
        %v443 = vld [vmem:[#allocation7 + $0x430] sm:$0xff]
        %v444 = vld [vmem:[#allocation7 + $0x438] sm:$0xff]
        %v445 = vld [vmem:[#allocation7 + $0x440] sm:$0xff]
        %v446 = vld [vmem:[#allocation7 + $0x448] sm:$0xff]
        %v447 = vld [vmem:[#allocation7 + $0x450] sm:$0xff]
        %v448 = vld [vmem:[#allocation7 + $0x458] sm:$0xff]
        %v449 = vld [vmem:[#allocation7 + $0x460] sm:$0xff]
        %v450 = vld [vmem:[#allocation7 + $0x468] sm:$0xff]
        %v451 = vld [vmem:[#allocation7 + $0x470] sm:$0xff]
        %v452 = vld [vmem:[#allocation7 + $0x478] sm:$0xff]
        %453 = vmatprep.subr.mxu0 %v310
        %454 = vmatpush1.msra.mxu0 %v309
        %455 = vmatprep.subr.mxu0 %v319
        %456 = vmatpush1.msra.mxu0 %v318
        %457 = vmatprep.subr.mxu0 %v328
        %458 = vmatpush1.msra.mxu0 %v327
        %459 = vmatprep.subr.mxu0 %v337
        %460 = vmatpush1.msra.mxu0 %v336
        %461 = vmatprep.subr.mxu0 %v346
        %462 = vmatpush1.msra.mxu0 %v345
        %463 = vmatprep.subr.mxu0 %v355
        %464 = vmatpush1.msra.mxu0 %v354
        %465 = vmatprep.subr.mxu0 %v364
        %466 = vmatpush1.msra.mxu0 %v363
        %467 = vmatprep.subr.mxu0 %v373
        %468 = vmatpush1.msra.mxu0 %v372
        %469 = vmatprep.subr.mxu0 %v382
        %470 = vmatpush1.msra.mxu0 %v381
        %471 = vmatprep.subr.mxu0 %v391
        %472 = vmatpush1.msra.mxu0 %v390
        %473 = vmatprep.subr.mxu0 %v400
        %474 = vmatpush1.msra.mxu0 %v399
        %475 = vmatprep.subr.mxu0 %v409
        %476 = vmatpush1.msra.mxu0 %v408
        %477 = vmatprep.subr.mxu0 %v418
        %478 = vmatpush1.msra.mxu0 %v417
        %479 = vmatprep.subr.mxu0 %v427
        %480 = vmatpush1.msra.mxu0 %v426
        %481 = vmatprep.subr.mxu0 %v436
        %482 = vmatpush1.msra.mxu0 %v435
        %483 = vmatprep.subr.mxu0 %v445
        %484 = vmatpush1.msra.mxu0 %v444
        %485 = vmatprep.subr.mxu0 0.0
        %486 = vmatpush1.msra.mxu0 0.0
        %487 = vmatprep.subr.mxu0 0.0
        %488 = vmatpush1.msra.mxu0 0.0
        %489 = vmatprep.subr.mxu0 0.0
        %490 = vmatpush1.msra.mxu0 0.0
        %491 = vmatprep.subr.mxu0 0.0
        %492 = vmatpush1.msra.mxu0 0.0
        %493 = vmatprep.subr.mxu0 0.0
        %494 = vmatpush1.msra.mxu0 0.0
        %495 = vmatprep.subr.mxu0 0.0
        %496 = vmatpush1.msra.mxu0 0.0
        %497 = vmatprep.subr.mxu0 0.0
        %498 = vmatpush1.msra.mxu0 0.0
        %499 = vmatprep.subr.mxu0 0.0
        %500 = vmatpush1.msra.mxu0 0.0
        %501 = vmatprep.subr.mxu0 0.0
        %502 = vmatpush1.msra.mxu0 0.0
        %503 = vmatprep.subr.mxu0 0.0
        %504 = vmatpush1.msra.mxu0 0.0
        %505 = vmatprep.subr.mxu0 0.0
        %506 = vmatpush1.msra.mxu0 0.0
        %507 = vmatprep.subr.mxu0 0.0
        %508 = vmatpush1.msra.mxu0 0.0
        %509 = vmatprep.subr.mxu0 0.0
        %510 = vmatpush1.msra.mxu0 0.0
        %511 = vmatprep.subr.mxu0 0.0
        %512 = vmatpush1.msra.mxu0 0.0
        %513 = vmatprep.subr.mxu0 0.0
        %514 = vmatpush1.msra.mxu0 0.0
        %515 = vmatprep.subr.mxu0 0.0
        %516 = vmatpush1.msra.mxu0 0.0
        %517 = vmatprep.mubr.f32.mxu0 0.0
        %518 = vmatmul.mubr.f32.gmra.mrb[0].mxu0 %v293
        %v519 = vpop.f32.mrb[0].mxu0
        %v520 = vpop.f32.mrb[0].mxu0
        %521 = vmatprep.mubr.f32.mxu0 0.0
        %522 = vmatmul.mubr.f32.gmra.mrb[0].mxu0 %v294
        %v523 = vpop.f32.mrb[0].mxu0
        %v524 = vpop.f32.mrb[0].mxu0
        %525 = vmatprep.mubr.f32.mxu0 0.0
        %526 = vmatmul.mubr.f32.gmra.mrb[0].mxu0 %v295
        %v527 = vpop.f32.mrb[0].mxu0
        %v528 = vadd.f32 0.0, %v527
        %v529 = vpop.f32.mrb[0].mxu0
        %v530 = vadd.f32 0.0, %v529
        %531 = vmatprep.mubr.f32.mxu0 0.0
        %532 = vmatmul.mubr.f32.gmra.mrb[0].mxu0 %v296
        %v533 = vpop.f32.mrb[0].mxu0
        %v534 = vadd.f32 0.0, %v533
        %v535 = vpop.f32.mrb[0].mxu0
        %v536 = vadd.f32 0.0, %v535
        %537 = vmatprep.mubr.f32.mxu0 0.0
        %538 = vmatmul.mubr.f32.gmra.mrb[0].mxu0 %v297
        %v539 = vpop.f32.mrb[0].mxu0
        %v540 = vadd.f32 0.0, %v539
        %v541 = vpop.f32.mrb[0].mxu0
        %v542 = vadd.f32 0.0, %v541
        %543 = vmatprep.mubr.f32.mxu0 0.0
        %544 = vmatmul.mubr.f32.gmra.mrb[0].mxu0 %v298
        %v545 = vpop.f32.mrb[0].mxu0
        %v546 = vadd.f32 0.0, %v545
        %v547 = vpop.f32.mrb[0].mxu0
        %v548 = vadd.f32 0.0, %v547
        %549 = vmatprep.mubr.f32.mxu0 0.0
        %550 = vmatmul.mubr.f32.gmra.mrb[0].mxu0 %v299
        %v551 = vpop.f32.mrb[0].mxu0
        %v552 = vadd.f32 0.0, %v551
        %v553 = vpop.f32.mrb[0].mxu0
        %v554 = vadd.f32 0.0, %v553
        %555 = vmatprep.mubr.f32.mxu0 0.0
        %556 = vmatmul.mubr.f32.gmra.mrb[0].mxu0 %v300
        %v557 = vpop.f32.mrb[0].mxu0
        %v558 = vadd.f32 0.0, %v557
        %v559 = vpop.f32.mrb[0].mxu0
        %v560 = vadd.f32 0.0, %v559
        %561 = vmatprep.mubr.f32.mxu0 0.0
        %562 = vmatmul.mubr.f32.gmra.mrb[0].mxu0 %v301
        %v563 = vpop.f32.mrb[0].mxu0
        %v564 = vadd.f32 0.0, %v563
        %v565 = vpop.f32.mrb[0].mxu0
        %v566 = vadd.f32 0.0, %v565
        %567 = vmatprep.mubr.f32.mxu0 0.0
        %568 = vmatmul.mubr.f32.gmra.mrb[0].mxu0 %v302
        %v569 = vpop.f32.mrb[0].mxu0
        %v570 = vadd.f32 0.0, %v569
        %v571 = vpop.f32.mrb[0].mxu0
        %v572 = vadd.f32 0.0, %v571
        %573 = vmatprep.mubr.f32.mxu0 0.0
        %574 = vmatmul.mubr.f32.gmra.mrb[0].mxu0 %v303
        %v575 = vpop.f32.mrb[0].mxu0
        %v576 = vadd.f32 0.0, %v575
        %v577 = vpop.f32.mrb[0].mxu0
        %v578 = vadd.f32 0.0, %v577
        %579 = vmatprep.mubr.f32.mxu0 0.0
        %580 = vmatmul.mubr.f32.gmra.mrb[0].mxu0 %v304
        %v581 = vpop.f32.mrb[0].mxu0
        %v582 = vadd.f32 0.0, %v581
        %v583 = vpop.f32.mrb[0].mxu0
        %v584 = vadd.f32 0.0, %v583
        %585 = vmatprep.mubr.f32.mxu0 0.0
        %586 = vmatmul.mubr.f32.gmra.mrb[0].mxu0 %v305
        %v587 = vpop.f32.mrb[0].mxu0
        %v588 = vadd.f32 0.0, %v587
        %v589 = vpop.f32.mrb[0].mxu0
        %v590 = vadd.f32 0.0, %v589
        %591 = vmatprep.mubr.f32.mxu0 0.0
        %592 = vmatmul.mubr.f32.gmra.mrb[0].mxu0 %v306
        %v593 = vpop.f32.mrb[0].mxu0
        %v594 = vadd.f32 0.0, %v593
        %v595 = vpop.f32.mrb[0].mxu0
        %v596 = vadd.f32 0.0, %v595
        %597 = vmatprep.mubr.f32.mxu0 0.0
        %598 = vmatmul.mubr.f32.gmra.mrb[0].mxu0 %v307
        %v599 = vpop.f32.mrb[0].mxu0
        %v600 = vadd.f32 0.0, %v599
        %v601 = vpop.f32.mrb[0].mxu0
        %v602 = vadd.f32 0.0, %v601
        %603 = vmatprep.mubr.f32.mxu0 0.0
        %604 = vmatmul.mubr.f32.gmra.mrb[0].mxu0 %v308
        %v605 = vpop.f32.mrb[0].mxu0
        %v606 = vadd.f32 0.0, %v605
        %v607 = vpop.f32.mrb[0].mxu0
        %v608 = vadd.f32 0.0, %v607
        %609 = vmatprep.mubr.f32.mxu0 0.0
        %610 = vmatmul.mubr.f32.gmra.mrb[0].mxu0 %v291
        %v611 = vpop.f32.mrb[0].mxu0
        %v612 = vadd.f32 0.0, %v611
        %v613 = vpop.f32.mrb[0].mxu0
        %v614 = vadd.f32 0.0, %v613
        %615 = vmatprep.mubr.f32.mxu0 0.0
        %616 = vmatmul.mubr.f32.gmra.mrb[0].mxu0 %v292
        %v617 = vpop.f32.mrb[0].mxu0
        %v618 = vadd.f32 0.0, %v617
        %v619 = vpop.f32.mrb[0].mxu0
        %v620 = vadd.f32 0.0, %v619
        %621 = vdwg.mxu0
        %622 = vmatprep.subr.mxu0 %v312
        %623 = vmatpush1.msra.mxu0 %v311
        %624 = vmatprep.subr.mxu0 %v321
        %625 = vmatpush1.msra.mxu0 %v320
        %626 = vmatprep.subr.mxu0 %v330
        %627 = vmatpush1.msra.mxu0 %v329
        %628 = vmatprep.subr.mxu0 %v339
        %629 = vmatpush1.msra.mxu0 %v338
        %630 = vmatprep.subr.mxu0 %v348
        %631 = vmatpush1.msra.mxu0 %v347
        %632 = vmatprep.subr.mxu0 %v357
        %633 = vmatpush1.msra.mxu0 %v356
        %634 = vmatprep.subr.mxu0 %v366
        %635 = vmatpush1.msra.mxu0 %v365
        %636 = vmatprep.subr.mxu0 %v375
        %637 = vmatpush1.msra.mxu0 %v374
        %638 = vmatprep.subr.mxu0 %v384
        %639 = vmatpush1.msra.mxu0 %v383
        %640 = vmatprep.subr.mxu0 %v393
        %641 = vmatpush1.msra.mxu0 %v392
        %642 = vmatprep.subr.mxu0 %v402
        %643 = vmatpush1.msra.mxu0 %v401
        %644 = vmatprep.subr.mxu0 %v411
        %645 = vmatpush1.msra.mxu0 %v410
        %646 = vmatprep.subr.mxu0 %v420
        %647 = vmatpush1.msra.mxu0 %v419
        %648 = vmatprep.subr.mxu0 %v429
        %649 = vmatpush1.msra.mxu0 %v428
        %650 = vmatprep.subr.mxu0 %v438
        %651 = vmatpush1.msra.mxu0 %v437
        %652 = vmatprep.subr.mxu0 %v447
        %653 = vmatpush1.msra.mxu0 %v446
        %654 = vmatprep.subr.mxu0 0.0
        %655 = vmatpush1.msra.mxu0 0.0
        %656 = vmatprep.subr.mxu0 0.0
        %657 = vmatpush1.msra.mxu0 0.0
        %658 = vmatprep.subr.mxu0 0.0
        %659 = vmatpush1.msra.mxu0 0.0
        %660 = vmatprep.subr.mxu0 0.0
        %661 = vmatpush1.msra.mxu0 0.0
        %662 = vmatprep.subr.mxu0 0.0
        %663 = vmatpush1.msra.mxu0 0.0
        %664 = vmatprep.subr.mxu0 0.0
        %665 = vmatpush1.msra.mxu0 0.0
        %666 = vmatprep.subr.mxu0 0.0
        %667 = vmatpush1.msra.mxu0 0.0
        %668 = vmatprep.subr.mxu0 0.0
        %669 = vmatpush1.msra.mxu0 0.0
        %670 = vmatprep.subr.mxu0 0.0
        %671 = vmatpush1.msra.mxu0 0.0
        %672 = vmatprep.subr.mxu0 0.0
        %673 = vmatpush1.msra.mxu0 0.0
        %674 = vmatprep.subr.mxu0 0.0
        %675 = vmatpush1.msra.mxu0 0.0
        %676 = vmatprep.subr.mxu0 0.0
        %677 = vmatpush1.msra.mxu0 0.0
        %678 = vmatprep.subr.mxu0 0.0
        %679 = vmatpush1.msra.mxu0 0.0
        %680 = vmatprep.subr.mxu0 0.0
        %681 = vmatpush1.msra.mxu0 0.0
        %682 = vmatprep.subr.mxu0 0.0
        %683 = vmatpush1.msra.mxu0 0.0
        %684 = vmatprep.subr.mxu0 0.0
        %685 = vmatpush1.msra.mxu0 0.0
        %686 = vmatprep.mubr.f32.mxu0 0.0
        %687 = vmatmul.mubr.f32.gmra.mrb[0].mxu0 %v293
        %v688 = vpop.f32.mrb[0].mxu0
        %v689 = vpop.f32.mrb[0].mxu0
        %v690 = vadd.f32 0.0, %v689
        %691 = vmatprep.mubr.f32.mxu0 0.0
        %692 = vmatmul.mubr.f32.gmra.mrb[0].mxu0 %v294
        %v693 = vpop.f32.mrb[0].mxu0
        %v694 = vpop.f32.mrb[0].mxu0
        %v695 = vadd.f32 0.0, %v694
        %696 = vmatprep.mubr.f32.mxu0 0.0
        %697 = vmatmul.mubr.f32.gmra.mrb[0].mxu0 %v295
        %v698 = vpop.f32.mrb[0].mxu0
        %v699 = vadd.f32 0.0, %v698
        %v700 = vpop.f32.mrb[0].mxu0
        %v701 = vadd.f32 0.0, %v700
        %702 = vmatprep.mubr.f32.mxu0 0.0
        %703 = vmatmul.mubr.f32.gmra.mrb[0].mxu0 %v296
        %v704 = vpop.f32.mrb[0].mxu0
        %v705 = vadd.f32 0.0, %v704
        %v706 = vpop.f32.mrb[0].mxu0
        %v707 = vadd.f32 0.0, %v706
        %708 = vmatprep.mubr.f32.mxu0 0.0
        %709 = vmatmul.mubr.f32.gmra.mrb[0].mxu0 %v297
        %v710 = vpop.f32.mrb[0].mxu0
        %v711 = vadd.f32 0.0, %v710
        %v712 = vpop.f32.mrb[0].mxu0
        %v713 = vadd.f32 0.0, %v712
        %714 = vmatprep.mubr.f32.mxu0 0.0
        %715 = vmatmul.mubr.f32.gmra.mrb[0].mxu0 %v298
        %v716 = vpop.f32.mrb[0].mxu0
        %v717 = vadd.f32 0.0, %v716
        %v718 = vpop.f32.mrb[0].mxu0
        %v719 = vadd.f32 0.0, %v718
        %720 = vmatprep.mubr.f32.mxu0 0.0
        %721 = vmatmul.mubr.f32.gmra.mrb[0].mxu0 %v299
        %v722 = vpop.f32.mrb[0].mxu0
        %v723 = vadd.f32 0.0, %v722
        %v724 = vpop.f32.mrb[0].mxu0
        %v725 = vadd.f32 0.0, %v724
        %726 = vmatprep.mubr.f32.mxu0 0.0
        %727 = vmatmul.mubr.f32.gmra.mrb[0].mxu0 %v300
        %v728 = vpop.f32.mrb[0].mxu0
        %v729 = vadd.f32 0.0, %v728
        %v730 = vpop.f32.mrb[0].mxu0
        %v731 = vadd.f32 0.0, %v730
        %732 = vmatprep.mubr.f32.mxu0 0.0
        %733 = vmatmul.mubr.f32.gmra.mrb[0].mxu0 %v301
        %v734 = vpop.f32.mrb[0].mxu0
        %v735 = vadd.f32 0.0, %v734
        %v736 = vpop.f32.mrb[0].mxu0
        %v737 = vadd.f32 0.0, %v736
        %738 = vmatprep.mubr.f32.mxu0 0.0
        %739 = vmatmul.mubr.f32.gmra.mrb[0].mxu0 %v302
        %v740 = vpop.f32.mrb[0].mxu0
        %v741 = vadd.f32 0.0, %v740
        %v742 = vpop.f32.mrb[0].mxu0
        %v743 = vadd.f32 0.0, %v742
        %744 = vmatprep.mubr.f32.mxu0 0.0
        %745 = vmatmul.mubr.f32.gmra.mrb[0].mxu0 %v303
        %v746 = vpop.f32.mrb[0].mxu0
        %v747 = vadd.f32 0.0, %v746
        %v748 = vpop.f32.mrb[0].mxu0
        %v749 = vadd.f32 0.0, %v748
        %750 = vmatprep.mubr.f32.mxu0 0.0
        %751 = vmatmul.mubr.f32.gmra.mrb[0].mxu0 %v304
        %v752 = vpop.f32.mrb[0].mxu0
        %v753 = vadd.f32 0.0, %v752
        %v754 = vpop.f32.mrb[0].mxu0
        %v755 = vadd.f32 0.0, %v754
        %756 = vmatprep.mubr.f32.mxu0 0.0
        %757 = vmatmul.mubr.f32.gmra.mrb[0].mxu0 %v305
        %v758 = vpop.f32.mrb[0].mxu0
        %v759 = vadd.f32 0.0, %v758
        %v760 = vpop.f32.mrb[0].mxu0
        %v761 = vadd.f32 0.0, %v760
        %762 = vmatprep.mubr.f32.mxu0 0.0
        %763 = vmatmul.mubr.f32.gmra.mrb[0].mxu0 %v306
        %v764 = vpop.f32.mrb[0].mxu0
        %v765 = vadd.f32 0.0, %v764
        %v766 = vpop.f32.mrb[0].mxu0
        %v767 = vadd.f32 0.0, %v766
        %768 = vmatprep.mubr.f32.mxu0 0.0
        %769 = vmatmul.mubr.f32.gmra.mrb[0].mxu0 %v307
        %v770 = vpop.f32.mrb[0].mxu0
        %v771 = vadd.f32 0.0, %v770
        %v772 = vpop.f32.mrb[0].mxu0
        %v773 = vadd.f32 0.0, %v772
        %774 = vmatprep.mubr.f32.mxu0 0.0
        %775 = vmatmul.mubr.f32.gmra.mrb[0].mxu0 %v308
        %v776 = vpop.f32.mrb[0].mxu0
        %v777 = vadd.f32 0.0, %v776
        %v778 = vpop.f32.mrb[0].mxu0
        %v779 = vadd.f32 0.0, %v778
        %780 = vmatprep.mubr.f32.mxu0 0.0
        %781 = vmatmul.mubr.f32.gmra.mrb[0].mxu0 %v291
        %v782 = vpop.f32.mrb[0].mxu0
        %v783 = vadd.f32 0.0, %v782
        %v784 = vpop.f32.mrb[0].mxu0
        %785 = vmatprep.mubr.f32.mxu0 0.0
        %786 = vmatmul.mubr.f32.gmra.mrb[0].mxu0 %v292
        %v787 = vpop.f32.mrb[0].mxu0
        %v788 = vadd.f32 0.0, %v787
        %v789 = vpop.f32.mrb[0].mxu0
        %790 = vdwg.mxu0
        %791 = vmatprep.subr.mxu0 %v314
        %792 = vmatpush1.msra.mxu0 %v313
        %793 = vmatprep.subr.mxu0 %v323
        %794 = vmatpush1.msra.mxu0 %v322
        %795 = vmatprep.subr.mxu0 %v332
        %796 = vmatpush1.msra.mxu0 %v331
        %797 = vmatprep.subr.mxu0 %v341
        %798 = vmatpush1.msra.mxu0 %v340
        %799 = vmatprep.subr.mxu0 %v350
        %800 = vmatpush1.msra.mxu0 %v349
        %801 = vmatprep.subr.mxu0 %v359
        %802 = vmatpush1.msra.mxu0 %v358
        %803 = vmatprep.subr.mxu0 %v368
        %804 = vmatpush1.msra.mxu0 %v367
        %805 = vmatprep.subr.mxu0 %v377
        %806 = vmatpush1.msra.mxu0 %v376
        %807 = vmatprep.subr.mxu0 %v386
        %808 = vmatpush1.msra.mxu0 %v385
        %809 = vmatprep.subr.mxu0 %v395
        %810 = vmatpush1.msra.mxu0 %v394
        %811 = vmatprep.subr.mxu0 %v404
        %812 = vmatpush1.msra.mxu0 %v403
        %813 = vmatprep.subr.mxu0 %v413
        %814 = vmatpush1.msra.mxu0 %v412
        %815 = vmatprep.subr.mxu0 %v422
        %816 = vmatpush1.msra.mxu0 %v421
        %817 = vmatprep.subr.mxu0 %v431
        %818 = vmatpush1.msra.mxu0 %v430
        %819 = vmatprep.subr.mxu0 %v440
        %820 = vmatpush1.msra.mxu0 %v439
        %821 = vmatprep.subr.mxu0 %v449
        %822 = vmatpush1.msra.mxu0 %v448
        %823 = vmatprep.subr.mxu0 0.0
        %824 = vmatpush1.msra.mxu0 0.0
        %825 = vmatprep.subr.mxu0 0.0
        %826 = vmatpush1.msra.mxu0 0.0
        %827 = vmatprep.subr.mxu0 0.0
        %828 = vmatpush1.msra.mxu0 0.0
        %829 = vmatprep.subr.mxu0 0.0
        %830 = vmatpush1.msra.mxu0 0.0
        %831 = vmatprep.subr.mxu0 0.0
        %832 = vmatpush1.msra.mxu0 0.0
        %833 = vmatprep.subr.mxu0 0.0
        %834 = vmatpush1.msra.mxu0 0.0
        %835 = vmatprep.subr.mxu0 0.0
        %836 = vmatpush1.msra.mxu0 0.0
        %837 = vmatprep.subr.mxu0 0.0
        %838 = vmatpush1.msra.mxu0 0.0
        %839 = vmatprep.subr.mxu0 0.0
        %840 = vmatpush1.msra.mxu0 0.0
        %841 = vmatprep.subr.mxu0 0.0
        %842 = vmatpush1.msra.mxu0 0.0
        %843 = vmatprep.subr.mxu0 0.0
        %844 = vmatpush1.msra.mxu0 0.0
        %845 = vmatprep.subr.mxu0 0.0
        %846 = vmatpush1.msra.mxu0 0.0
        %847 = vmatprep.subr.mxu0 0.0
        %848 = vmatpush1.msra.mxu0 0.0
        %849 = vmatprep.subr.mxu0 0.0
        %850 = vmatpush1.msra.mxu0 0.0
        %851 = vmatprep.subr.mxu0 0.0
        %852 = vmatpush1.msra.mxu0 0.0
        %853 = vmatprep.subr.mxu0 0.0
        %854 = vmatpush1.msra.mxu0 0.0
        %855 = vmatprep.mubr.f32.mxu0 0.0
        %856 = vmatmul.mubr.f32.gmra.mrb[0].mxu0 %v293
        %v857 = vpop.f32.mrb[0].mxu0
        %v858 = vadd.f32 0.0, %v857
        %v859 = vpop.f32.mrb[0].mxu0
        %v860 = vadd.f32 0.0, %v859
        %861 = vmatprep.mubr.f32.mxu0 0.0
        %862 = vmatmul.mubr.f32.gmra.mrb[0].mxu0 %v294
        %v863 = vpop.f32.mrb[0].mxu0
        %v864 = vadd.f32 0.0, %v863
        %v865 = vpop.f32.mrb[0].mxu0
        %v866 = vadd.f32 0.0, %v865
        %867 = vmatprep.mubr.f32.mxu0 0.0
        %868 = vmatmul.mubr.f32.gmra.mrb[0].mxu0 %v295
        %v869 = vpop.f32.mrb[0].mxu0
        %v870 = vadd.f32 0.0, %v869
        %v871 = vpop.f32.mrb[0].mxu0
        %v872 = vadd.f32 0.0, %v871
        %873 = vmatprep.mubr.f32.mxu0 0.0
        %874 = vmatmul.mubr.f32.gmra.mrb[0].mxu0 %v296
        %v875 = vpop.f32.mrb[0].mxu0
        %v876 = vadd.f32 0.0, %v875
        %v877 = vpop.f32.mrb[0].mxu0
        %v878 = vadd.f32 0.0, %v877
        %879 = vmatprep.mubr.f32.mxu0 0.0
        %880 = vmatmul.mubr.f32.gmra.mrb[0].mxu0 %v297
        %v881 = vpop.f32.mrb[0].mxu0
        %v882 = vadd.f32 0.0, %v881
        %v883 = vpop.f32.mrb[0].mxu0
        %v884 = vadd.f32 0.0, %v883
        %885 = vmatprep.mubr.f32.mxu0 0.0
        %886 = vmatmul.mubr.f32.gmra.mrb[0].mxu0 %v298
        %v887 = vpop.f32.mrb[0].mxu0
        %v888 = vadd.f32 0.0, %v887
        %v889 = vpop.f32.mrb[0].mxu0
        %v890 = vadd.f32 0.0, %v889
        %891 = vmatprep.mubr.f32.mxu0 0.0
        %892 = vmatmul.mubr.f32.gmra.mrb[0].mxu0 %v299
        %v893 = vpop.f32.mrb[0].mxu0
        %v894 = vadd.f32 0.0, %v893
        %v895 = vpop.f32.mrb[0].mxu0
        %v896 = vadd.f32 0.0, %v895
        %897 = vmatprep.mubr.f32.mxu0 0.0
        %898 = vmatmul.mubr.f32.gmra.mrb[0].mxu0 %v300
        %v899 = vpop.f32.mrb[0].mxu0
        %v900 = vadd.f32 0.0, %v899
        %v901 = vpop.f32.mrb[0].mxu0
        %v902 = vadd.f32 0.0, %v901
        %903 = vmatprep.mubr.f32.mxu0 0.0
        %904 = vmatmul.mubr.f32.gmra.mrb[0].mxu0 %v301
        %v905 = vpop.f32.mrb[0].mxu0
        %v906 = vadd.f32 0.0, %v905
        %v907 = vpop.f32.mrb[0].mxu0
        %v908 = vadd.f32 0.0, %v907
        %909 = vmatprep.mubr.f32.mxu0 0.0
        %910 = vmatmul.mubr.f32.gmra.mrb[0].mxu0 %v302
        %v911 = vpop.f32.mrb[0].mxu0
        %v912 = vadd.f32 0.0, %v911
        %v913 = vpop.f32.mrb[0].mxu0
        %v914 = vadd.f32 0.0, %v913
        %915 = vmatprep.mubr.f32.mxu0 0.0
        %916 = vmatmul.mubr.f32.gmra.mrb[0].mxu0 %v303
        %v917 = vpop.f32.mrb[0].mxu0
        %v918 = vadd.f32 0.0, %v917
        %v919 = vpop.f32.mrb[0].mxu0
        %v920 = vadd.f32 0.0, %v919
        %921 = vmatprep.mubr.f32.mxu0 0.0
        %922 = vmatmul.mubr.f32.gmra.mrb[0].mxu0 %v304
        %v923 = vpop.f32.mrb[0].mxu0
        %v924 = vadd.f32 0.0, %v923
        %v925 = vpop.f32.mrb[0].mxu0
        %v926 = vadd.f32 0.0, %v925
        %927 = vmatprep.mubr.f32.mxu0 0.0
        %928 = vmatmul.mubr.f32.gmra.mrb[0].mxu0 %v305
        %v929 = vpop.f32.mrb[0].mxu0
        %v930 = vadd.f32 0.0, %v929
        %v931 = vpop.f32.mrb[0].mxu0
        %v932 = vadd.f32 0.0, %v931
        %933 = vmatprep.mubr.f32.mxu0 0.0
        %934 = vmatmul.mubr.f32.gmra.mrb[0].mxu0 %v306
        %v935 = vpop.f32.mrb[0].mxu0
        %v936 = vadd.f32 0.0, %v935
        %v937 = vpop.f32.mrb[0].mxu0
        %v938 = vadd.f32 0.0, %v937
        %939 = vmatprep.mubr.f32.mxu0 0.0
        %940 = vmatmul.mubr.f32.gmra.mrb[0].mxu0 %v307
        %v941 = vpop.f32.mrb[0].mxu0
        %v942 = vadd.f32 0.0, %v941
        %v943 = vpop.f32.mrb[0].mxu0
        %v944 = vadd.f32 0.0, %v943
        %945 = vmatprep.mubr.f32.mxu0 0.0
        %946 = vmatmul.mubr.f32.gmra.mrb[0].mxu0 %v308
        %v947 = vpop.f32.mrb[0].mxu0
        %v948 = vadd.f32 0.0, %v947
        %v949 = vpop.f32.mrb[0].mxu0
        %v950 = vadd.f32 0.0, %v949
        %951 = vmatprep.mubr.f32.mxu0 0.0
        %952 = vmatmul.mubr.f32.gmra.mrb[0].mxu0 %v291
        %v953 = vpop.f32.mrb[0].mxu0
        %v954 = vpop.f32.mrb[0].mxu0
        %955 = vmatprep.mubr.f32.mxu0 0.0
        %956 = vmatmul.mubr.f32.gmra.mrb[0].mxu0 %v292
        %v957 = vpop.f32.mrb[0].mxu0
        %v958 = vpop.f32.mrb[0].mxu0
        %959 = vdwg.mxu0
        %960 = vmatprep.subr.mxu0 %v316
        %961 = vmatpush1.msra.mxu0 %v315
        %962 = vmatprep.subr.mxu0 %v325
        %963 = vmatpush1.msra.mxu0 %v324
        %964 = vmatprep.subr.mxu0 %v334
        %965 = vmatpush1.msra.mxu0 %v333
        %966 = vmatprep.subr.mxu0 %v343
        %967 = vmatpush1.msra.mxu0 %v342
        %968 = vmatprep.subr.mxu0 %v352
        %969 = vmatpush1.msra.mxu0 %v351
        %970 = vmatprep.subr.mxu0 %v361
        %971 = vmatpush1.msra.mxu0 %v360
        %972 = vmatprep.subr.mxu0 %v370
        %973 = vmatpush1.msra.mxu0 %v369
        %974 = vmatprep.subr.mxu0 %v379
        %975 = vmatpush1.msra.mxu0 %v378
        %976 = vmatprep.subr.mxu0 %v388
        %977 = vmatpush1.msra.mxu0 %v387
        %978 = vmatprep.subr.mxu0 %v397
        %979 = vmatpush1.msra.mxu0 %v396
        %980 = vmatprep.subr.mxu0 %v406
        %981 = vmatpush1.msra.mxu0 %v405
        %982 = vmatprep.subr.mxu0 %v415
        %983 = vmatpush1.msra.mxu0 %v414
        %984 = vmatprep.subr.mxu0 %v424
        %985 = vmatpush1.msra.mxu0 %v423
        %986 = vmatprep.subr.mxu0 %v433
        %987 = vmatpush1.msra.mxu0 %v432
        %988 = vmatprep.subr.mxu0 %v442
        %989 = vmatpush1.msra.mxu0 %v441
        %990 = vmatprep.subr.mxu0 %v451
        %991 = vmatpush1.msra.mxu0 %v450
        %992 = vmatprep.subr.mxu0 0.0
        %993 = vmatpush1.msra.mxu0 0.0
        %994 = vmatprep.subr.mxu0 0.0
        %995 = vmatpush1.msra.mxu0 0.0
        %996 = vmatprep.subr.mxu0 0.0
        %997 = vmatpush1.msra.mxu0 0.0
        %998 = vmatprep.subr.mxu0 0.0
        %999 = vmatpush1.msra.mxu0 0.0
        %1000 = vmatprep.subr.mxu0 0.0
        %1001 = vmatpush1.msra.mxu0 0.0
        %1002 = vmatprep.subr.mxu0 0.0
        %1003 = vmatpush1.msra.mxu0 0.0
        %1004 = vmatprep.subr.mxu0 0.0
        %1005 = vmatpush1.msra.mxu0 0.0
        %1006 = vmatprep.subr.mxu0 0.0
        %1007 = vmatpush1.msra.mxu0 0.0
        %1008 = vmatprep.subr.mxu0 0.0
        %1009 = vmatpush1.msra.mxu0 0.0
        %1010 = vmatprep.subr.mxu0 0.0
        %1011 = vmatpush1.msra.mxu0 0.0
        %1012 = vmatprep.subr.mxu0 0.0
        %1013 = vmatpush1.msra.mxu0 0.0
        %1014 = vmatprep.subr.mxu0 0.0
        %1015 = vmatpush1.msra.mxu0 0.0
        %1016 = vmatprep.subr.mxu0 0.0
        %1017 = vmatpush1.msra.mxu0 0.0
        %1018 = vmatprep.subr.mxu0 0.0
        %1019 = vmatpush1.msra.mxu0 0.0
        %1020 = vmatprep.subr.mxu0 0.0
        %1021 = vmatpush1.msra.mxu0 0.0
        %1022 = vmatprep.subr.mxu0 0.0
        %1023 = vmatpush1.msra.mxu0 0.0
        %1024 = vmatprep.mubr.f32.mxu0 0.0
        %1025 = vmatmul.mubr.f32.gmra.mrb[0].mxu0 %v293
        %v1026 = vpop.f32.mrb[0].mxu0
        %v1027 = vadd.f32 0.0, %v1026
        %v1028 = vpop.f32.mrb[0].mxu0
        %v1029 = vadd.f32 0.0, %v1028
        %1030 = vmatprep.mubr.f32.mxu0 0.0
        %1031 = vmatmul.mubr.f32.gmra.mrb[0].mxu0 %v294
        %v1032 = vpop.f32.mrb[0].mxu0
        %v1033 = vadd.f32 0.0, %v1032
        %v1034 = vpop.f32.mrb[0].mxu0
        %v1035 = vadd.f32 0.0, %v1034
        %1036 = vmatprep.mubr.f32.mxu0 0.0
        %1037 = vmatmul.mubr.f32.gmra.mrb[0].mxu0 %v295
        %v1038 = vpop.f32.mrb[0].mxu0
        %v1039 = vadd.f32 0.0, %v1038
        %v1040 = vpop.f32.mrb[0].mxu0
        %v1041 = vadd.f32 0.0, %v1040
        %1042 = vmatprep.mubr.f32.mxu0 0.0
        %1043 = vmatmul.mubr.f32.gmra.mrb[0].mxu0 %v296
        %v1044 = vpop.f32.mrb[0].mxu0
        %v1045 = vadd.f32 0.0, %v1044
        %v1046 = vpop.f32.mrb[0].mxu0
        %v1047 = vadd.f32 0.0, %v1046
        %1048 = vmatprep.mubr.f32.mxu0 0.0
        %1049 = vmatmul.mubr.f32.gmra.mrb[0].mxu0 %v297
        %v1050 = vpop.f32.mrb[0].mxu0
        %v1051 = vadd.f32 0.0, %v1050
        %v1052 = vpop.f32.mrb[0].mxu0
        %v1053 = vadd.f32 0.0, %v1052
        %1054 = vmatprep.mubr.f32.mxu0 0.0
        %1055 = vmatmul.mubr.f32.gmra.mrb[0].mxu0 %v298
        %v1056 = vpop.f32.mrb[0].mxu0
        %v1057 = vadd.f32 0.0, %v1056
        %v1058 = vpop.f32.mrb[0].mxu0
        %v1059 = vadd.f32 0.0, %v1058
        %1060 = vmatprep.mubr.f32.mxu0 0.0
        %1061 = vmatmul.mubr.f32.gmra.mrb[0].mxu0 %v299
        %v1062 = vpop.f32.mrb[0].mxu0
        %v1063 = vadd.f32 0.0, %v1062
        %v1064 = vpop.f32.mrb[0].mxu0
        %v1065 = vadd.f32 0.0, %v1064
        %1066 = vmatprep.mubr.f32.mxu0 0.0
        %1067 = vmatmul.mubr.f32.gmra.mrb[0].mxu0 %v300
        %v1068 = vpop.f32.mrb[0].mxu0
        %v1069 = vadd.f32 0.0, %v1068
        %v1070 = vpop.f32.mrb[0].mxu0
        %v1071 = vadd.f32 0.0, %v1070
        %1072 = vmatprep.mubr.f32.mxu0 0.0
        %1073 = vmatmul.mubr.f32.gmra.mrb[0].mxu0 %v301
        %v1074 = vpop.f32.mrb[0].mxu0
        %v1075 = vadd.f32 0.0, %v1074
        %v1076 = vpop.f32.mrb[0].mxu0
        %v1077 = vadd.f32 0.0, %v1076
        %1078 = vmatprep.mubr.f32.mxu0 0.0
        %1079 = vmatmul.mubr.f32.gmra.mrb[0].mxu0 %v302
        %v1080 = vpop.f32.mrb[0].mxu0
        %v1081 = vadd.f32 0.0, %v1080
        %v1082 = vpop.f32.mrb[0].mxu0
        %v1083 = vadd.f32 0.0, %v1082
        %1084 = vmatprep.mubr.f32.mxu0 0.0
        %1085 = vmatmul.mubr.f32.gmra.mrb[0].mxu0 %v303
        %v1086 = vpop.f32.mrb[0].mxu0
        %v1087 = vadd.f32 0.0, %v1086
        %v1088 = vpop.f32.mrb[0].mxu0
        %v1089 = vadd.f32 0.0, %v1088
        %1090 = vmatprep.mubr.f32.mxu0 0.0
        %1091 = vmatmul.mubr.f32.gmra.mrb[0].mxu0 %v304
        %v1092 = vpop.f32.mrb[0].mxu0
        %v1093 = vadd.f32 0.0, %v1092
        %v1094 = vpop.f32.mrb[0].mxu0
        %v1095 = vadd.f32 0.0, %v1094
        %1096 = vmatprep.mubr.f32.mxu0 0.0
        %1097 = vmatmul.mubr.f32.gmra.mrb[0].mxu0 %v305
        %v1098 = vpop.f32.mrb[0].mxu0
        %v1099 = vadd.f32 0.0, %v1098
        %v1100 = vpop.f32.mrb[0].mxu0
        %v1101 = vadd.f32 0.0, %v1100
        %1102 = vmatprep.mubr.f32.mxu0 0.0
        %1103 = vmatmul.mubr.f32.gmra.mrb[0].mxu0 %v306
        %v1104 = vpop.f32.mrb[0].mxu0
        %v1105 = vadd.f32 0.0, %v1104
        %v1106 = vpop.f32.mrb[0].mxu0
        %v1107 = vadd.f32 0.0, %v1106
        %1108 = vmatprep.mubr.f32.mxu0 0.0
        %1109 = vmatmul.mubr.f32.gmra.mrb[0].mxu0 %v307
        %v1110 = vpop.f32.mrb[0].mxu0
        %v1111 = vadd.f32 0.0, %v1110
        %v1112 = vpop.f32.mrb[0].mxu0
        %v1113 = vadd.f32 0.0, %v1112
        %1114 = vmatprep.mubr.f32.mxu0 0.0
        %1115 = vmatmul.mubr.f32.gmra.mrb[0].mxu0 %v308
        %v1116 = vpop.f32.mrb[0].mxu0
        %v1117 = vadd.f32 0.0, %v1116
        %v1118 = vpop.f32.mrb[0].mxu0
        %v1119 = vadd.f32 0.0, %v1118
        %1120 = vmatprep.mubr.f32.mxu0 0.0
        %1121 = vmatmul.mubr.f32.gmra.mrb[0].mxu0 %v291
        %v1122 = vpop.f32.mrb[0].mxu0
        %v1123 = vpop.f32.mrb[0].mxu0
        %1124 = vmatprep.mubr.f32.mxu0 0.0
        %1125 = vmatmul.mubr.f32.gmra.mrb[0].mxu0 %v292
        %v1126 = vpop.f32.mrb[0].mxu0
        %v1127 = vpop.f32.mrb[0].mxu0
        %1128 = vdwg.mxu0
        %1129 = vmatprep.subr.mxu0 0.0
        %1130 = vmatpush1.msra.mxu0 %v317
        %1131 = vmatprep.subr.mxu0 0.0
        %1132 = vmatpush1.msra.mxu0 %v326
        %1133 = vmatprep.subr.mxu0 0.0
        %1134 = vmatpush1.msra.mxu0 %v335
        %1135 = vmatprep.subr.mxu0 0.0
        %1136 = vmatpush1.msra.mxu0 %v344
        %1137 = vmatprep.subr.mxu0 0.0
        %1138 = vmatpush1.msra.mxu0 %v353
        %1139 = vmatprep.subr.mxu0 0.0
        %1140 = vmatpush1.msra.mxu0 %v362
        %1141 = vmatprep.subr.mxu0 0.0
        %1142 = vmatpush1.msra.mxu0 %v371
        %1143 = vmatprep.subr.mxu0 0.0
        %1144 = vmatpush1.msra.mxu0 %v380
        %1145 = vmatprep.subr.mxu0 0.0
        %1146 = vmatpush1.msra.mxu0 %v389
        %1147 = vmatprep.subr.mxu0 0.0
        %1148 = vmatpush1.msra.mxu0 %v398
        %1149 = vmatprep.subr.mxu0 0.0
        %1150 = vmatpush1.msra.mxu0 %v407
        %1151 = vmatprep.subr.mxu0 0.0
        %1152 = vmatpush1.msra.mxu0 %v416
        %1153 = vmatprep.subr.mxu0 0.0
        %1154 = vmatpush1.msra.mxu0 %v425
        %1155 = vmatprep.subr.mxu0 0.0
        %1156 = vmatpush1.msra.mxu0 %v434
        %1157 = vmatprep.subr.mxu0 0.0
        %1158 = vmatpush1.msra.mxu0 %v443
        %1159 = vmatprep.subr.mxu0 0.0
        %1160 = vmatpush1.msra.mxu0 %v452
        %1161 = vmatprep.subr.mxu0 0.0
        %1162 = vmatpush1.msra.mxu0 0.0
        %1163 = vmatprep.subr.mxu0 0.0
        %1164 = vmatpush1.msra.mxu0 0.0
        %1165 = vmatprep.subr.mxu0 0.0
        %1166 = vmatpush1.msra.mxu0 0.0
        %1167 = vmatprep.subr.mxu0 0.0
        %1168 = vmatpush1.msra.mxu0 0.0
        %1169 = vmatprep.subr.mxu0 0.0
        %1170 = vmatpush1.msra.mxu0 0.0
        %1171 = vmatprep.subr.mxu0 0.0
        %1172 = vmatpush1.msra.mxu0 0.0
        %1173 = vmatprep.subr.mxu0 0.0
        %1174 = vmatpush1.msra.mxu0 0.0
        %1175 = vmatprep.subr.mxu0 0.0
        %1176 = vmatpush1.msra.mxu0 0.0
        %1177 = vmatprep.subr.mxu0 0.0
        %1178 = vmatpush1.msra.mxu0 0.0
        %1179 = vmatprep.subr.mxu0 0.0
        %1180 = vmatpush1.msra.mxu0 0.0
        %1181 = vmatprep.subr.mxu0 0.0
        %1182 = vmatpush1.msra.mxu0 0.0
        %1183 = vmatprep.subr.mxu0 0.0
        %1184 = vmatpush1.msra.mxu0 0.0
        %1185 = vmatprep.subr.mxu0 0.0
        %1186 = vmatpush1.msra.mxu0 0.0
        %1187 = vmatprep.subr.mxu0 0.0
        %1188 = vmatpush1.msra.mxu0 0.0
        %1189 = vmatprep.subr.mxu0 0.0
        %1190 = vmatpush1.msra.mxu0 0.0
        %1191 = vmatprep.subr.mxu0 0.0
        %1192 = vmatpush1.msra.mxu0 0.0
        %1193 = vmatprep.mubr.f32.mxu0 0.0
        %1194 = vmatmul.mubr.f32.gmra.mrb[0].mxu0 %v293
        %v1195 = vpop.f32.mrb[0].mxu0
        %v1196 = vadd.f32 0.0, %v1195
        %v1197 = vpop.f32.mrb[0].mxu0
        %1198 = vmatprep.mubr.f32.mxu0 0.0
        %1199 = vmatmul.mubr.f32.gmra.mrb[0].mxu0 %v294
        %v1200 = vpop.f32.mrb[0].mxu0
        %v1201 = vadd.f32 0.0, %v1200
        %v1202 = vpop.f32.mrb[0].mxu0
        %1203 = vmatprep.mubr.f32.mxu0 0.0
        %1204 = vmatmul.mubr.f32.gmra.mrb[0].mxu0 %v295
        %v1205 = vpop.f32.mrb[0].mxu0
        %v1206 = vadd.f32 0.0, %v1205
        %v1207 = vpop.f32.mrb[0].mxu0
        %1208 = vmatprep.mubr.f32.mxu0 0.0
        %1209 = vmatmul.mubr.f32.gmra.mrb[0].mxu0 %v296
        %v1210 = vpop.f32.mrb[0].mxu0
        %v1211 = vadd.f32 0.0, %v1210
        %v1212 = vpop.f32.mrb[0].mxu0
        %1213 = vmatprep.mubr.f32.mxu0 0.0
        %1214 = vmatmul.mubr.f32.gmra.mrb[0].mxu0 %v297
        %v1215 = vpop.f32.mrb[0].mxu0
        %v1216 = vadd.f32 0.0, %v1215
        %v1217 = vpop.f32.mrb[0].mxu0
        %1218 = vmatprep.mubr.f32.mxu0 0.0
        %1219 = vmatmul.mubr.f32.gmra.mrb[0].mxu0 %v298
        %v1220 = vpop.f32.mrb[0].mxu0
        %v1221 = vadd.f32 0.0, %v1220
        %v1222 = vpop.f32.mrb[0].mxu0
        %1223 = vmatprep.mubr.f32.mxu0 0.0
        %1224 = vmatmul.mubr.f32.gmra.mrb[0].mxu0 %v299
        %v1225 = vpop.f32.mrb[0].mxu0
        %v1226 = vadd.f32 0.0, %v1225
        %v1227 = vpop.f32.mrb[0].mxu0
        %1228 = vmatprep.mubr.f32.mxu0 0.0
        %1229 = vmatmul.mubr.f32.gmra.mrb[0].mxu0 %v300
        %v1230 = vpop.f32.mrb[0].mxu0
        %v1231 = vadd.f32 0.0, %v1230
        %v1232 = vpop.f32.mrb[0].mxu0
        %1233 = vmatprep.mubr.f32.mxu0 0.0
        %1234 = vmatmul.mubr.f32.gmra.mrb[0].mxu0 %v301
        %v1235 = vpop.f32.mrb[0].mxu0
        %v1236 = vadd.f32 0.0, %v1235
        %v1237 = vpop.f32.mrb[0].mxu0
        %1238 = vmatprep.mubr.f32.mxu0 0.0
        %1239 = vmatmul.mubr.f32.gmra.mrb[0].mxu0 %v302
        %v1240 = vpop.f32.mrb[0].mxu0
        %v1241 = vadd.f32 0.0, %v1240
        %v1242 = vpop.f32.mrb[0].mxu0
        %1243 = vmatprep.mubr.f32.mxu0 0.0
        %1244 = vmatmul.mubr.f32.gmra.mrb[0].mxu0 %v303
        %v1245 = vpop.f32.mrb[0].mxu0
        %v1246 = vadd.f32 0.0, %v1245
        %v1247 = vpop.f32.mrb[0].mxu0
        %1248 = vmatprep.mubr.f32.mxu0 0.0
        %1249 = vmatmul.mubr.f32.gmra.mrb[0].mxu0 %v304
        %v1250 = vpop.f32.mrb[0].mxu0
        %v1251 = vadd.f32 0.0, %v1250
        %v1252 = vpop.f32.mrb[0].mxu0
        %1253 = vmatprep.mubr.f32.mxu0 0.0
        %1254 = vmatmul.mubr.f32.gmra.mrb[0].mxu0 %v305
        %v1255 = vpop.f32.mrb[0].mxu0
        %v1256 = vadd.f32 0.0, %v1255
        %v1257 = vpop.f32.mrb[0].mxu0
        %1258 = vmatprep.mubr.f32.mxu0 0.0
        %1259 = vmatmul.mubr.f32.gmra.mrb[0].mxu0 %v306
        %v1260 = vpop.f32.mrb[0].mxu0
        %v1261 = vadd.f32 0.0, %v1260
        %v1262 = vpop.f32.mrb[0].mxu0
        %1263 = vmatprep.mubr.f32.mxu0 0.0
        %1264 = vmatmul.mubr.f32.gmra.mrb[0].mxu0 %v307
        %v1265 = vpop.f32.mrb[0].mxu0
        %v1266 = vadd.f32 0.0, %v1265
        %v1267 = vpop.f32.mrb[0].mxu0
        %1268 = vmatprep.mubr.f32.mxu0 0.0
        %1269 = vmatmul.mubr.f32.gmra.mrb[0].mxu0 %v308
        %v1270 = vpop.f32.mrb[0].mxu0
        %v1271 = vadd.f32 0.0, %v1270
        %v1272 = vpop.f32.mrb[0].mxu0
        %1273 = vmatprep.mubr.f32.mxu0 0.0
        %1274 = vmatmul.mubr.f32.gmra.mrb[0].mxu0 %v291
        %v1275 = vpop.f32.mrb[0].mxu0
        %v1276 = vpop.f32.mrb[0].mxu0
        %1277 = vmatprep.mubr.f32.mxu0 0.0
        %1278 = vmatmul.mubr.f32.gmra.mrb[0].mxu0 %v292
        %v1279 = vpop.f32.mrb[0].mxu0
        %v1280 = vpop.f32.mrb[0].mxu0
        %1281 = vdwg.mxu0
        %vm1298 = vcmask 1046528
        %v1299 = vrot.slane %v690, 1
        %v1300 = vrot.slane %v695, 1
        %v1301 = vsel %vm1298, %v1299, %v1300
        %v1302 = vrot.slane %v701, 1
        %v1303 = vrot.slane %v707, 1
        %v1304 = vsel %vm1298, %v1302, %v1303
        %v1305 = vrot.slane %v713, 1
        %v1306 = vrot.slane %v719, 1
        %v1307 = vsel %vm1298, %v1305, %v1306
        %v1308 = vrot.slane %v725, 1
        %v1309 = vrot.slane %v731, 1
        %v1310 = vsel %vm1298, %v1308, %v1309
        %v1311 = vrot.slane %v737, 1
        %v1312 = vrot.slane %v743, 1
        %v1313 = vsel %vm1298, %v1311, %v1312
        %v1314 = vrot.slane %v749, 1
        %v1315 = vrot.slane %v755, 1
        %v1316 = vsel %vm1298, %v1314, %v1315
        %v1317 = vrot.slane %v761, 1
        %v1318 = vrot.slane %v767, 1
        %v1319 = vsel %vm1298, %v1317, %v1318
        %v1320 = vrot.slane %v773, 1
        %v1321 = vrot.slane %v779, 1
        %v1322 = vsel %vm1298, %v1320, %v1321
        %v1339 = vsel %vm1298, %v1300, 0.0
        %v1340 = vsel %vm1298, %v1303, 0.0
        %v1341 = vsel %vm1298, %v1306, 0.0
        %v1342 = vsel %vm1298, %v1309, 0.0
        %v1343 = vsel %vm1298, %v1312, 0.0
        %v1344 = vsel %vm1298, %v1315, 0.0
        %v1345 = vsel %vm1298, %v1318, 0.0
        %v1346 = vsel %vm1298, %v1321, 0.0
        %v1347 = vadd.f32 %v860, %v1301
        %v1348 = vadd.f32 %v866, %v1339
        %v1349 = vadd.f32 %v872, %v1304
        %v1350 = vadd.f32 %v878, %v1340
        %v1351 = vadd.f32 %v884, %v1307
        %v1352 = vadd.f32 %v890, %v1341
        %v1353 = vadd.f32 %v896, %v1310
        %v1354 = vadd.f32 %v902, %v1342
        %v1355 = vadd.f32 %v908, %v1313
        %v1356 = vadd.f32 %v914, %v1343
        %v1357 = vadd.f32 %v920, %v1316
        %v1358 = vadd.f32 %v926, %v1344
        %v1359 = vadd.f32 %v932, %v1319
        %v1360 = vadd.f32 %v938, %v1345
        %v1361 = vadd.f32 %v944, %v1322
        %v1362 = vadd.f32 %v950, %v1346
        %v1363 = vadd.f32 %v1029, %v530
        %v1364 = vadd.f32 %v1035, %v536
        %v1365 = vadd.f32 %v1041, %v542
        %v1366 = vadd.f32 %v1047, %v548
        %v1367 = vadd.f32 %v1053, %v554
        %v1368 = vadd.f32 %v1059, %v560
        %v1369 = vadd.f32 %v1065, %v566
        %v1370 = vadd.f32 %v1071, %v572
        %v1371 = vadd.f32 %v1077, %v578
        %v1372 = vadd.f32 %v1083, %v584
        %v1373 = vadd.f32 %v1089, %v590
        %v1374 = vadd.f32 %v1095, %v596
        %v1375 = vadd.f32 %v1101, %v602
        %v1376 = vadd.f32 %v1107, %v608
        %v1377 = vadd.f32 %v1113, %v614
        %v1378 = vadd.f32 %v1119, %v620
        %v1395 = vrot.slane %v1027, 1
        %v1396 = vrot.slane %v1033, 1
        %v1397 = vsel %vm1298, %v1395, %v1396
        %v1398 = vrot.slane %v1039, 1
        %v1399 = vrot.slane %v1045, 1
        %v1400 = vsel %vm1298, %v1398, %v1399
        %v1401 = vrot.slane %v1051, 1
        %v1402 = vrot.slane %v1057, 1
        %v1403 = vsel %vm1298, %v1401, %v1402
        %v1404 = vrot.slane %v1063, 1
        %v1405 = vrot.slane %v1069, 1
        %v1406 = vsel %vm1298, %v1404, %v1405
        %v1407 = vrot.slane %v1075, 1
        %v1408 = vrot.slane %v1081, 1
        %v1409 = vsel %vm1298, %v1407, %v1408
        %v1410 = vrot.slane %v1087, 1
        %v1411 = vrot.slane %v1093, 1
        %v1412 = vsel %vm1298, %v1410, %v1411
        %v1413 = vrot.slane %v1099, 1
        %v1414 = vrot.slane %v1105, 1
        %v1415 = vsel %vm1298, %v1413, %v1414
        %v1416 = vrot.slane %v1111, 1
        %v1417 = vrot.slane %v1117, 1
        %v1418 = vsel %vm1298, %v1416, %v1417
        %v1435 = vsel %vm1298, %v1396, 0.0
        %v1436 = vsel %vm1298, %v1399, 0.0
        %v1437 = vsel %vm1298, %v1402, 0.0
        %v1438 = vsel %vm1298, %v1405, 0.0
        %v1439 = vsel %vm1298, %v1408, 0.0
        %v1440 = vsel %vm1298, %v1411, 0.0
        %v1441 = vsel %vm1298, %v1414, 0.0
        %v1442 = vsel %vm1298, %v1417, 0.0
        %v1443 = vadd.f32 %v1196, %v1397
        %v1444 = vadd.f32 %v1201, %v1435
        %v1445 = vadd.f32 %v1206, %v1400
        %v1446 = vadd.f32 %v1211, %v1436
        %v1447 = vadd.f32 %v1216, %v1403
        %v1448 = vadd.f32 %v1221, %v1437
        %v1449 = vadd.f32 %v1226, %v1406
        %v1450 = vadd.f32 %v1231, %v1438
        %v1451 = vadd.f32 %v1236, %v1409
        %v1452 = vadd.f32 %v1241, %v1439
        %v1453 = vadd.f32 %v1246, %v1412
        %v1454 = vadd.f32 %v1251, %v1440
        %v1455 = vadd.f32 %v1256, %v1415
        %v1456 = vadd.f32 %v1261, %v1441
        %v1457 = vadd.f32 %v1266, %v1418
        %v1458 = vadd.f32 %v1271, %v1442
        %v1459 = vadd.f32 %v1443, %v699
        %v1460 = vadd.f32 %v1444, %v705
        %v1461 = vadd.f32 %v1445, %v711
        %v1462 = vadd.f32 %v1446, %v717
        %v1463 = vadd.f32 %v1447, %v723
        %v1464 = vadd.f32 %v1448, %v729
        %v1465 = vadd.f32 %v1449, %v735
        %v1466 = vadd.f32 %v1450, %v741
        %v1467 = vadd.f32 %v1451, %v747
        %v1468 = vadd.f32 %v1452, %v753
        %v1469 = vadd.f32 %v1453, %v759
        %v1470 = vadd.f32 %v1454, %v765
        %v1471 = vadd.f32 %v1455, %v771
        %v1472 = vadd.f32 %v1456, %v777
        %v1473 = vadd.f32 %v1457, %v783
        %v1474 = vadd.f32 %v1458, %v788
        %v1491 = vrot.slane %v528, 1
        %v1492 = vrot.slane %v534, 1
        %v1493 = vsel %vm1298, %v1491, %v1492
        %v1494 = vrot.slane %v540, 1
        %v1495 = vrot.slane %v546, 1
        %v1496 = vsel %vm1298, %v1494, %v1495
        %v1497 = vrot.slane %v552, 1
        %v1498 = vrot.slane %v558, 1
        %v1499 = vsel %vm1298, %v1497, %v1498
        %v1500 = vrot.slane %v564, 1
        %v1501 = vrot.slane %v570, 1
        %v1502 = vsel %vm1298, %v1500, %v1501
        %v1503 = vrot.slane %v576, 1
        %v1504 = vrot.slane %v582, 1
        %v1505 = vsel %vm1298, %v1503, %v1504
        %v1506 = vrot.slane %v588, 1
        %v1507 = vrot.slane %v594, 1
        %v1508 = vsel %vm1298, %v1506, %v1507
        %v1509 = vrot.slane %v600, 1
        %v1510 = vrot.slane %v606, 1
        %v1511 = vsel %vm1298, %v1509, %v1510
        %v1512 = vrot.slane %v612, 1
        %v1513 = vrot.slane %v618, 1
        %v1514 = vsel %vm1298, %v1512, %v1513
        %v1531 = vsel %vm1298, %v1492, 0.0
        %v1532 = vsel %vm1298, %v1495, 0.0
        %v1533 = vsel %vm1298, %v1498, 0.0
        %v1534 = vsel %vm1298, %v1501, 0.0
        %v1535 = vsel %vm1298, %v1504, 0.0
        %v1536 = vsel %vm1298, %v1507, 0.0
        %v1537 = vsel %vm1298, %v1510, 0.0
        %v1538 = vsel %vm1298, %v1513, 0.0
        %v1539 = vadd.f32 %v1459, %v1493
        %v1540 = vadd.f32 %v1460, %v1531
        %v1541 = vadd.f32 %v1461, %v1496
        %v1542 = vadd.f32 %v1462, %v1532
        %v1543 = vadd.f32 %v1463, %v1499
        %v1544 = vadd.f32 %v1464, %v1533
        %v1545 = vadd.f32 %v1465, %v1502
        %v1546 = vadd.f32 %v1466, %v1534
        %v1547 = vadd.f32 %v1467, %v1505
        %v1548 = vadd.f32 %v1468, %v1535
        %v1549 = vadd.f32 %v1469, %v1508
        %v1550 = vadd.f32 %v1470, %v1536
        %v1551 = vadd.f32 %v1471, %v1511
        %v1552 = vadd.f32 %v1472, %v1537
        %v1553 = vadd.f32 %v1473, %v1514
        %v1554 = vadd.f32 %v1474, %v1538
        %1555 = vst [vmem:[%s277] sm:$0xff] %v858
        %1556 = vst [vmem:[%s277 + $0x10] sm:$0xff] %v864
        %1557 = vst [vmem:[%s277 + $0x40] sm:$0xff] %v870
        %1558 = vst [vmem:[%s277 + $0x50] sm:$0xff] %v876
        %1559 = vst [vmem:[%s277 + $0x80] sm:$0xff] %v882
        %1560 = vst [vmem:[%s277 + $0x90] sm:$0xff] %v888
        %1561 = vst [vmem:[%s277 + $0xc0] sm:$0xff] %v894
        %1562 = vst [vmem:[%s277 + $0xd0] sm:$0xff] %v900
        %1563 = vst [vmem:[%s277 + $0x100] sm:$0xff] %v906
        %1564 = vst [vmem:[%s277 + $0x110] sm:$0xff] %v912
        %1565 = vst [vmem:[%s277 + $0x140] sm:$0xff] %v918
        %1566 = vst [vmem:[%s277 + $0x150] sm:$0xff] %v924
        %1567 = vst [vmem:[%s277 + $0x180] sm:$0xff] %v930
        %1568 = vst [vmem:[%s277 + $0x190] sm:$0xff] %v936
        %1569 = vst [vmem:[%s277 + $0x1c0] sm:$0xff] %v942
        %1570 = vst [vmem:[%s277 + $0x1d0] sm:$0xff] %v948
        %1571 = vst [vmem:[%s277 + $0x8] sm:$0xff] %v1347
        %1572 = vst [vmem:[%s277 + $0x18] sm:$0xff] %v1348
        %1573 = vst [vmem:[%s277 + $0x48] sm:$0xff] %v1349
        %1574 = vst [vmem:[%s277 + $0x58] sm:$0xff] %v1350
        %1575 = vst [vmem:[%s277 + $0x88] sm:$0xff] %v1351
        %1576 = vst [vmem:[%s277 + $0x98] sm:$0xff] %v1352
        %1577 = vst [vmem:[%s277 + $0xc8] sm:$0xff] %v1353
        %1578 = vst [vmem:[%s277 + $0xd8] sm:$0xff] %v1354
        %1579 = vst [vmem:[%s277 + $0x108] sm:$0xff] %v1355
        %1580 = vst [vmem:[%s277 + $0x118] sm:$0xff] %v1356
        %1581 = vst [vmem:[%s277 + $0x148] sm:$0xff] %v1357
        %1582 = vst [vmem:[%s277 + $0x158] sm:$0xff] %v1358
        %1583 = vst [vmem:[%s277 + $0x188] sm:$0xff] %v1359
        %1584 = vst [vmem:[%s277 + $0x198] sm:$0xff] %v1360
        %1585 = vst [vmem:[%s277 + $0x1c8] sm:$0xff] %v1361
        %1586 = vst [vmem:[%s277 + $0x1d8] sm:$0xff] %v1362
        %s1587 = scalar_lea.vmem %s277, 32 [#allocation8]
        %1588 = vst [vmem:[%s1587] sm:$0xff] %v1363
        %1589 = vst [vmem:[%s1587 + $0x10] sm:$0xff] %v1364
        %1590 = vst [vmem:[%s1587 + $0x40] sm:$0xff] %v1365
        %1591 = vst [vmem:[%s1587 + $0x50] sm:$0xff] %v1366
        %1592 = vst [vmem:[%s1587 + $0x80] sm:$0xff] %v1367
        %1593 = vst [vmem:[%s1587 + $0x90] sm:$0xff] %v1368
        %1594 = vst [vmem:[%s1587 + $0xc0] sm:$0xff] %v1369
        %1595 = vst [vmem:[%s1587 + $0xd0] sm:$0xff] %v1370
        %1596 = vst [vmem:[%s1587 + $0x100] sm:$0xff] %v1371
        %1597 = vst [vmem:[%s1587 + $0x110] sm:$0xff] %v1372
        %1598 = vst [vmem:[%s1587 + $0x140] sm:$0xff] %v1373
        %1599 = vst [vmem:[%s1587 + $0x150] sm:$0xff] %v1374
        %1600 = vst [vmem:[%s1587 + $0x180] sm:$0xff] %v1375
        %1601 = vst [vmem:[%s1587 + $0x190] sm:$0xff] %v1376
        %1602 = vst [vmem:[%s1587 + $0x1c0] sm:$0xff] %v1377
        %1603 = vst [vmem:[%s1587 + $0x1d0] sm:$0xff] %v1378
        %1604 = vst [vmem:[%s1587 + $0x8] sm:$0xff] %v1539
        %1605 = vst [vmem:[%s1587 + $0x18] sm:$0xff] %v1540
        %1606 = vst [vmem:[%s1587 + $0x48] sm:$0xff] %v1541
        %1607 = vst [vmem:[%s1587 + $0x58] sm:$0xff] %v1542
        %1608 = vst [vmem:[%s1587 + $0x88] sm:$0xff] %v1543
        %1609 = vst [vmem:[%s1587 + $0x98] sm:$0xff] %v1544
        %1610 = vst [vmem:[%s1587 + $0xc8] sm:$0xff] %v1545
        %1611 = vst [vmem:[%s1587 + $0xd8] sm:$0xff] %v1546
        %1612 = vst [vmem:[%s1587 + $0x108] sm:$0xff] %v1547
        %1613 = vst [vmem:[%s1587 + $0x118] sm:$0xff] %v1548
        %1614 = vst [vmem:[%s1587 + $0x148] sm:$0xff] %v1549
        %1615 = vst [vmem:[%s1587 + $0x158] sm:$0xff] %v1550
        %1616 = vst [vmem:[%s1587 + $0x188] sm:$0xff] %v1551
        %1617 = vst [vmem:[%s1587 + $0x198] sm:$0xff] %v1552
        %1618 = vst [vmem:[%s1587 + $0x1c8] sm:$0xff] %v1553
        %1619 = vst [vmem:[%s1587 + $0x1d8] sm:$0xff] %v1554
        %s1620 = sand.u32 %s130, 1
        %s1621 = scalar_lea.sflag [#allocation4], %s1620
        %s1622 = sand.u32 %s130, 1
        %s1623 = smul.addr %s1622, 512
        %s1624 = scalar_lea.vmem [#allocation8], %s1623
        // Predicated region
        $region45: #{tpu_custom_call.1} parent=31 // pred_check
          %p1625 = pneg %p140
        $region46: #{tpu_custom_call.1} parent=31 // pred_check_branch
          %1627 = sbr.rel (%p1625) target = $region48
        $region47: #{tpu_custom_call.1} parent=31 // pred_region
          %s1628 = smul.u32 8, %s28
          %s1630 = ssub.s32 8192, 8192
          %1631 = vsyncadd %s1621, %s1630
          %s1632 = smul.addr %s1628, 8
          %s1633 = smul.addr %s27, 128
          %s1634 = sadd.s32 %s1632, %s1633
          %s1635 = smul.addr %s1634, 128
          %s1636 = scalar_lea.hbm %s3, %s1635
          %s1637 = sshll.u32 %s1624, 4
          %s1638 = int_to_ptr.vmem [resolvable:$true] %s1637
          %1643 = dma.vmem_to_hbm [thread:$0]  %s1638, 8192, %s1636, %s1621, 256, 256, 16
        $region48: #{tpu_custom_call.1} parent=31 // pred_fallthru
          _
      $region32: #{tpu_custom_call.1} parent=5 // pred_fallthru
        _
      %p1644 = scmp.le.s32.totalorder 2, %s18
      // Predicated region
      $region49: #{tpu_custom_call.1} parent=5 // pred_check
        %p1645 = pneg %p1644
      $region50: #{tpu_custom_call.1} parent=5 // pred_check_branch
        %1647 = sbr.rel (%p1645) target = $region52
      $region51: #{tpu_custom_call.1} parent=5 // pred_region
        %s1648 = ssub.s32 %s18, 2
        // Predicated region
        $region53: #{tpu_custom_call.1} parent=51 // pred_check
          %p1649 = pneg %p146
        $region54: #{tpu_custom_call.1} parent=51 // pred_check_branch
          %1651 = sbr.rel (%p1649) target = $region56
        $region55: #{tpu_custom_call.1} parent=51 // pred_region
          %s1652 = sand.u32 %s131, 1
          %s1653 = scalar_lea.sflag [#allocation4], %s1652
          %s1654 = sand.u32 %s131, 1
          %s1655 = smul.addr %s1654, 512
          %s1656 = scalar_lea.vmem [#allocation8], %s1655
          %1657 = dma.done %s1653, 8192
        $region56: #{tpu_custom_call.1} parent=51 // pred_fallthru
          _
      $region52: #{tpu_custom_call.1} parent=5 // pred_fallthru
        _
    $region6: #{tpu_custom_call.1} parent=1 // loop_footer
      %s22 = sadd.s32 1, %s18
    $region7: #{tpu_custom_call.1} parent=1 // loop_footer_branch
      %17 = sbr.rel target = $region3
    $region8: #{tpu_custom_call.1} parent=1 // loop_exit
      _
    %1658 = vsyncpa [#allocation3], 1
    %s1659 = scalar_lea.sflag [#allocation3], 1
    %1660 = vsyncpa %s1659, 1
    %1661 = vsyncpa [#allocation6], 1
    %s1662 = scalar_lea.sflag [#allocation6], 1
    %1663 = vsyncpa %s1662, 1
    %1664 = vsyncpa [#allocation4], 1
    %s1665 = scalar_lea.sflag [#allocation4], 1
    %1666 = vsyncpa %s1665, 1

</llo_original>
